<compile_context>
chip_gen: v5e
topology: v5e:2x2
jax: 0.10.0
libtpu: 0.0.40
codegen_flags: <defaults>
</compile_context>

<pallas_src>
import functools

import jax
import jax.numpy as jnp
from jax.experimental import pallas as pl
from jax.experimental.pallas import tpu as pltpu

HIDDEN = 64
NUM_HIDDEN_LAYERS = 7


def _round_up(x, m):
    return (x + m - 1) // m * m


def _mlp_kernel(x_ref, w_in_ref, b_in_ref, w_h_ref, b_h_ref, w_out_t_ref,
                b_out_ref, o_ref, *, sub, n_sub):
    """One batch tile (BT = n_sub * sub rows) of the 9-layer MLP.

    x_ref:       [BT, D]      f32
    w_in_ref:    [D, 64]      f32   (input layer kept f32; D is tiny)
    b_in_ref:    [1, 64]      f32
    w_h_ref:     [7, 64, 64]  bf16
    b_h_ref:     [7, 1, 64]   f32
    w_out_t_ref: [1, 64]      bf16  (transposed -> result comes out [1, sub])
    b_out_ref:   [1, 1]       f32
    o_ref:       [n_sub, sub] f32   (lane-dense; reshaped to [B, 1] in the wrapper)
    """

    def body(c, carry):
        row0 = pl.multiple_of(c * sub, sub)
        xb = x_ref[pl.ds(row0, sub), :]                               # [sub, D] f32

        # Input layer in f32 (accuracy; negligible FLOPs), single cast to bf16.
        acc = jnp.dot(xb, w_in_ref[...],
                      preferred_element_type=jnp.float32) + b_in_ref[...]
        h = jnp.maximum(acc, 0.0).astype(jnp.bfloat16)

        # 7 hidden layers, statically unrolled; bf16 MXU operands, f32 accumulate.
        for i in range(NUM_HIDDEN_LAYERS):
            acc = jnp.dot(h, w_h_ref[i],
                          preferred_element_type=jnp.float32) + b_h_ref[i]
            h = jnp.maximum(acc, 0.0).astype(jnp.bfloat16)

        # Output layer: contract over the hidden dim so the result is the lane-dense
        # row [1, sub] instead of the 1-lane column [sub, 1].
        logits = jax.lax.dot_general(
            w_out_t_ref[...], h,
            dimension_numbers=(((1,), (1,)), ((), ())),
            preferred_element_type=jnp.float32) + b_out_ref[...]
        o_ref[pl.ds(c, 1), :] = jax.nn.sigmoid(logits)
        return carry

    jax.lax.fori_loop(0, n_sub, body, 0)


def prepare_kernel_params(params):
    """One-time (outside the forward path) packing/casting of the f32 params.

    Hidden/output matmul operands go to bf16; input-layer weight stays f32; biases f32.
    w_out is transposed to [1, 64] so the final dot produces a lane-dense [1, sub] row.
    """
    w_in, b_in, w_h, b_h, w_out, b_out = params
    return (w_in,                                   # [D, 64]    f32
            b_in,                                   # [1, 64]    f32
            w_h.astype(jnp.bfloat16),               # [7, 64, 64] bf16
            b_h,                                    # [7, 1, 64] f32
            jnp.transpose(w_out).astype(jnp.bfloat16),  # [1, 64] bf16
            b_out)                                  # [1, 1]     f32


def mlp_forward(x, kernel_params, *, batch_tile=2048, sub_tile=256):
    """x: [B, D] float32. kernel_params: from prepare_kernel_params. Returns [B, 1] f32."""
    w_in, b_in, w_h, b_h, w_out_t, b_out = kernel_params
    B, D = x.shape
    assert sub_tile % 128 == 0, "sub_tile must be a multiple of 128 (lane width)"
    assert batch_tile % sub_tile == 0, "batch_tile must be a multiple of sub_tile"

    SUB = sub_tile
    BT = min(batch_tile, _round_up(B, SUB))   # multiple of SUB, >= SUB
    n_sub = BT // SUB
    num_tiles = pl.cdiv(B, BT)

    # Constant index_map -> DMA'd once, VMEM-resident across the whole grid.
    const_spec = lambda a: pl.BlockSpec(a.shape, lambda i, _nd=a.ndim: (0,) * _nd)

    flops = 2 * B * (D * HIDDEN + NUM_HIDDEN_LAYERS * HIDDEN * HIDDEN + HIDDEN * 1)
    weight_bytes = (w_in.size + b_in.size + b_h.size + b_out.size) * 4 \
                   + (w_h.size + w_out_t.size) * 2
    bytes_accessed = B * D * 4 + num_tiles * BT * 4 + weight_bytes

    kernel = functools.partial(_mlp_kernel, sub=SUB, n_sub=n_sub)

    out = pl.pallas_call(
        kernel,
        out_shape=jax.ShapeDtypeStruct((num_tiles, n_sub, SUB), jnp.float32),
        grid=(num_tiles,),
        in_specs=[
            pl.BlockSpec((BT, D), lambda i: (i, 0)),   # activations stream over batch
            const_spec(w_in),
            const_spec(b_in),
            const_spec(w_h),
            const_spec(b_h),
            const_spec(w_out_t),
            const_spec(b_out),
        ],
        out_specs=pl.BlockSpec((None, n_sub, SUB), lambda i: (i, 0, 0)),
        compiler_params=pltpu.CompilerParams(
            # On v7x: if a profile shows one idle TensorCore, use pltpu.CORE_PARALLEL here.
            dimension_semantics=("parallel",),
        ),
        cost_estimate=pl.CostEstimate(
            flops=int(flops),
            transcendentals=int(B),
            bytes_accessed=int(bytes_accessed),
        ),
    )(x, w_in, b_in, w_h, b_h, w_out_t, b_out)

    # Rows of (num_tiles, n_sub, SUB) are already in batch order; drop padding rows.
    return out.reshape(num_tiles * BT, 1)[:B]


def init_params(key, input_dim, output_dim):
    """Deterministic init mimicking PyTorch nn.Linear default (U[-1/sqrt(fan_in), +])."""
    keys = jax.random.split(key, 3)

    def linear_init(k, fan_in, fan_out):
        k1, k2 = jax.random.split(k)
        bound = 1.0 / jnp.sqrt(float(fan_in))
        w = jax.random.uniform(k1, (fan_in, fan_out), jnp.float32, -bound, bound)
        b = jax.random.uniform(k2, (1, fan_out), jnp.float32, -bound, bound)
        return w, b

    w_in, b_in = linear_init(keys[0], input_dim, HIDDEN)

    hks = jax.random.split(keys[1], NUM_HIDDEN_LAYERS)
    w_h_list, b_h_list = [], []
    for i in range(NUM_HIDDEN_LAYERS):
        w, b = linear_init(hks[i], HIDDEN, HIDDEN)
        w_h_list.append(w)
        b_h_list.append(b)
    w_h = jnp.stack(w_h_list)              # [7, 64, 64]
    b_h = jnp.stack(b_h_list)              # [7, 1, 64]

    w_out, b_out = linear_init(keys[2], HIDDEN, output_dim)
    return (w_in, b_in, w_h, b_h, w_out, b_out)


def mlp_reference(x, params):
    """Pure-JAX f32 reference of the PyTorch forward."""
    w_in, b_in, w_h, b_h, w_out, b_out = params
    h = jax.nn.relu(x @ w_in + b_in)
    for i in range(NUM_HIDDEN_LAYERS):
        h = jax.nn.relu(h @ w_h[i] + b_h[i])
    return jax.nn.sigmoid(h @ w_out + b_out)


if __name__ == "__main__":
    INPUT_DIM = 16     # stand-in for len(ALL_COLS)
    OUTPUT_DIM = 1
    BATCH = 1024       # exercises a 2-step grid and the inner sub-chunk loop
    BATCH_TILE = 512   # production would use 1024-4096 (default 2048)
    SUB_TILE = 256

    key = jax.random.PRNGKey(0)
    k_x, k_p = jax.random.split(key)
    # MinMax-scaled features in [0, 1]
    x = jax.random.uniform(k_x, (BATCH, INPUT_DIM), jnp.float32)
    params = init_params(k_p, INPUT_DIM, OUTPUT_DIM)
    # One-time bf16 packing of the matmul weights, OUTSIDE the per-call forward path.
    kparams = prepare_kernel_params(params)

    out = mlp_forward(x, kparams, batch_tile=BATCH_TILE, sub_tile=SUB_TILE)
    out = jax.block_until_ready(out)
    ref = mlp_reference(x, params)
    assert out.shape == (BATCH, OUTPUT_DIM)
    # hidden layers run bf16 MXU operands -> relaxed tolerance vs f32 reference
    assert jnp.allclose(out, ref, atol=2e-2, rtol=2e-2), (
        f"mismatch vs reference, max abs diff = {jnp.max(jnp.abs(out - ref))}")

    # Partial-tile path: B not a multiple of the batch tile (padded rows are discarded).
    B2 = 300
    x2 = x[:B2]
    out2 = jax.block_until_ready(
        mlp_forward(x2, kparams, batch_tile=BATCH_TILE, sub_tile=SUB_TILE))
    ref2 = mlp_reference(x2, params)
    assert out2.shape == (B2, OUTPUT_DIM)
    assert jnp.allclose(out2, ref2, atol=2e-2, rtol=2e-2), (
        f"partial-tile mismatch, max abs diff = {jnp.max(jnp.abs(out2 - ref2))}")

    print("KERNEL_OK")
</pallas_src>

<mosaic_0001>
module attributes {stable_mosaic.version = 11 : i64} {
  func.func @_mlp_kernel(%arg0: i32, %arg1: memref<512x16xf32, #tpu.memory_space<vmem>>, %arg2: memref<16x64xf32, #tpu.memory_space<vmem>>, %arg3: memref<1x64xf32, #tpu.memory_space<vmem>>, %arg4: memref<7x64x64xbf16, #tpu.memory_space<vmem>>, %arg5: memref<7x1x64xf32, #tpu.memory_space<vmem>>, %arg6: memref<1x64xbf16, #tpu.memory_space<vmem>>, %arg7: memref<1x1xf32, #tpu.memory_space<vmem>>, %arg8: memref<1x2x256xf32, #tpu.memory_space<vmem>>) attributes {dimension_semantics = [#tpu.dimension_semantics<parallel>], iteration_bounds = array<i64: 2>, scalar_prefetch = 0 : i64, scratch_operands = 0 : i64, tpu.core_type = #tpu.core_type<tc>, window_params = [{transform_indices = @transform_0, window_bounds = array<i64: 512, 16>}, {pipeline_mode = #tpu.pipeline_mode<synchronous>, transform_indices = @transform_1, window_bounds = array<i64: 16, 64>}, {pipeline_mode = #tpu.pipeline_mode<synchronous>, transform_indices = @transform_2, window_bounds = array<i64: 1, 64>}, {pipeline_mode = #tpu.pipeline_mode<synchronous>, transform_indices = @transform_3, window_bounds = array<i64: 7, 64, 64>}, {pipeline_mode = #tpu.pipeline_mode<synchronous>, transform_indices = @transform_4, window_bounds = array<i64: 7, 1, 64>}, {pipeline_mode = #tpu.pipeline_mode<synchronous>, transform_indices = @transform_5, window_bounds = array<i64: 1, 64>}, {pipeline_mode = #tpu.pipeline_mode<synchronous>, transform_indices = @transform_6, window_bounds = array<i64: 1, 1>}, {transform_indices = @transform_7, window_bounds = array<i64: 1, 2, 256>}]} {
    %c0_i32 = arith.constant 0 : i32
    %c2_i32 = arith.constant 2 : i32
    %0 = arith.addi %c0_i32, %c2_i32 : i32
    %c1_i32 = arith.constant 1 : i32
    scf.for %arg9 = %c0_i32 to %0 step %c1_i32  : i32 {
      %c256_i32 = arith.constant 256 : i32
      %1 = arith.muli %arg9, %c256_i32 : i32
      %2 = tpu.assume_multiple %1, 256 : i32
      %3 = arith.index_cast %2 : i32 to index
      %c0 = arith.constant 0 : index
      %4 = vector.load %arg1[%3, %c0] : memref<512x16xf32, #tpu.memory_space<vmem>>, vector<256x16xf32>
      %c0_1 = arith.constant 0 : index
      %c0_2 = arith.constant 0 : index
      %5 = vector.load %arg2[%c0_1, %c0_2] : memref<16x64xf32, #tpu.memory_space<vmem>>, vector<16x64xf32>
      %cst = arith.constant dense<0.000000e+00> : vector<256x64xf32>
      %6 = tpu.matmul %4, %5, %cst {dimension_numbers = #tpu.dot_dimension_numbers<[1], [0], [0], [1], [0, 0, 1, 1], [], []>} : vector<256x16xf32>, vector<16x64xf32>, vector<256x64xf32> -> vector<256x64xf32>
      %c0_3 = arith.constant 0 : index
      %c0_4 = arith.constant 0 : index
      %7 = vector.load %arg3[%c0_3, %c0_4] : memref<1x64xf32, #tpu.memory_space<vmem>>, vector<1x64xf32>
      %8 = vector.broadcast %7 : vector<1x64xf32> to vector<256x64xf32>
      %9 = arith.addf %6, %8 : vector<256x64xf32>
      %cst_5 = arith.constant 0.000000e+00 : f32
      %10 = vector.broadcast %cst_5 : f32 to vector<256x64xf32>
      %11 = arith.maximumf %9, %10 : vector<256x64xf32>
      %12 = arith.truncf %11 : vector<256x64xf32> to vector<256x64xbf16>
      %c0_6 = arith.constant 0 : index
      %c0_7 = arith.constant 0 : index
      %c0_8 = arith.constant 0 : index
      %13 = vector.load %arg4[%c0_6, %c0_7, %c0_8] : memref<7x64x64xbf16, #tpu.memory_space<vmem>>, vector<1x64x64xbf16>
      %14 = vector.shape_cast %13 : vector<1x64x64xbf16> to vector<64x64xbf16>
      %cst_9 = arith.constant dense<0.000000e+00> : vector<256x64xf32>
      %15 = tpu.matmul %12, %14, %cst_9 {dimension_numbers = #tpu.dot_dimension_numbers<[1], [0], [0], [1], [0, 0, 1, 1], [], []>} : vector<256x64xbf16>, vector<64x64xbf16>, vector<256x64xf32> -> vector<256x64xf32>
      %c0_10 = arith.constant 0 : index
      %c0_11 = arith.constant 0 : index
      %c0_12 = arith.constant 0 : index
      %16 = vector.load %arg5[%c0_10, %c0_11, %c0_12] : memref<7x1x64xf32, #tpu.memory_space<vmem>>, vector<1x1x64xf32>
      %17 = vector.shape_cast %16 : vector<1x1x64xf32> to vector<1x64xf32>
      %18 = vector.broadcast %17 : vector<1x64xf32> to vector<256x64xf32>
      %19 = arith.addf %15, %18 : vector<256x64xf32>
      %cst_13 = arith.constant 0.000000e+00 : f32
      %20 = vector.broadcast %cst_13 : f32 to vector<256x64xf32>
      %21 = arith.maximumf %19, %20 : vector<256x64xf32>
      %22 = arith.truncf %21 : vector<256x64xf32> to vector<256x64xbf16>
      %c1 = arith.constant 1 : index
      %c0_14 = arith.constant 0 : index
      %c0_15 = arith.constant 0 : index
      %23 = vector.load %arg4[%c1, %c0_14, %c0_15] : memref<7x64x64xbf16, #tpu.memory_space<vmem>>, vector<1x64x64xbf16>
      %24 = vector.shape_cast %23 : vector<1x64x64xbf16> to vector<64x64xbf16>
      %cst_16 = arith.constant dense<0.000000e+00> : vector<256x64xf32>
      %25 = tpu.matmul %22, %24, %cst_16 {dimension_numbers = #tpu.dot_dimension_numbers<[1], [0], [0], [1], [0, 0, 1, 1], [], []>} : vector<256x64xbf16>, vector<64x64xbf16>, vector<256x64xf32> -> vector<256x64xf32>
      %c1_17 = arith.constant 1 : index
      %c0_18 = arith.constant 0 : index
      %c0_19 = arith.constant 0 : index
      %26 = vector.load %arg5[%c1_17, %c0_18, %c0_19] : memref<7x1x64xf32, #tpu.memory_space<vmem>>, vector<1x1x64xf32>
      %27 = vector.shape_cast %26 : vector<1x1x64xf32> to vector<1x64xf32>
      %28 = vector.broadcast %27 : vector<1x64xf32> to vector<256x64xf32>
      %29 = arith.addf %25, %28 : vector<256x64xf32>
      %cst_20 = arith.constant 0.000000e+00 : f32
      %30 = vector.broadcast %cst_20 : f32 to vector<256x64xf32>
      %31 = arith.maximumf %29, %30 : vector<256x64xf32>
      %32 = arith.truncf %31 : vector<256x64xf32> to vector<256x64xbf16>
      %c2 = arith.constant 2 : index
      %c0_21 = arith.constant 0 : index
      %c0_22 = arith.constant 0 : index
      %33 = vector.load %arg4[%c2, %c0_21, %c0_22] : memref<7x64x64xbf16, #tpu.memory_space<vmem>>, vector<1x64x64xbf16>
      %34 = vector.shape_cast %33 : vector<1x64x64xbf16> to vector<64x64xbf16>
      %cst_23 = arith.constant dense<0.000000e+00> : vector<256x64xf32>
      %35 = tpu.matmul %32, %34, %cst_23 {dimension_numbers = #tpu.dot_dimension_numbers<[1], [0], [0], [1], [0, 0, 1, 1], [], []>} : vector<256x64xbf16>, vector<64x64xbf16>, vector<256x64xf32> -> vector<256x64xf32>
      %c2_24 = arith.constant 2 : index
      %c0_25 = arith.constant 0 : index
      %c0_26 = arith.constant 0 : index
      %36 = vector.load %arg5[%c2_24, %c0_25, %c0_26] : memref<7x1x64xf32, #tpu.memory_space<vmem>>, vector<1x1x64xf32>
      %37 = vector.shape_cast %36 : vector<1x1x64xf32> to vector<1x64xf32>
      %38 = vector.broadcast %37 : vector<1x64xf32> to vector<256x64xf32>
      %39 = arith.addf %35, %38 : vector<256x64xf32>
      %cst_27 = arith.constant 0.000000e+00 : f32
      %40 = vector.broadcast %cst_27 : f32 to vector<256x64xf32>
      %41 = arith.maximumf %39, %40 : vector<256x64xf32>
      %42 = arith.truncf %41 : vector<256x64xf32> to vector<256x64xbf16>
      %c3 = arith.constant 3 : index
      %c0_28 = arith.constant 0 : index
      %c0_29 = arith.constant 0 : index
      %43 = vector.load %arg4[%c3, %c0_28, %c0_29] : memref<7x64x64xbf16, #tpu.memory_space<vmem>>, vector<1x64x64xbf16>
      %44 = vector.shape_cast %43 : vector<1x64x64xbf16> to vector<64x64xbf16>
      %cst_30 = arith.constant dense<0.000000e+00> : vector<256x64xf32>
      %45 = tpu.matmul %42, %44, %cst_30 {dimension_numbers = #tpu.dot_dimension_numbers<[1], [0], [0], [1], [0, 0, 1, 1], [], []>} : vector<256x64xbf16>, vector<64x64xbf16>, vector<256x64xf32> -> vector<256x64xf32>
      %c3_31 = arith.constant 3 : index
      %c0_32 = arith.constant 0 : index
      %c0_33 = arith.constant 0 : index
      %46 = vector.load %arg5[%c3_31, %c0_32, %c0_33] : memref<7x1x64xf32, #tpu.memory_space<vmem>>, vector<1x1x64xf32>
      %47 = vector.shape_cast %46 : vector<1x1x64xf32> to vector<1x64xf32>
      %48 = vector.broadcast %47 : vector<1x64xf32> to vector<256x64xf32>
      %49 = arith.addf %45, %48 : vector<256x64xf32>
      %cst_34 = arith.constant 0.000000e+00 : f32
      %50 = vector.broadcast %cst_34 : f32 to vector<256x64xf32>
      %51 = arith.maximumf %49, %50 : vector<256x64xf32>
      %52 = arith.truncf %51 : vector<256x64xf32> to vector<256x64xbf16>
      %c4 = arith.constant 4 : index
      %c0_35 = arith.constant 0 : index
      %c0_36 = arith.constant 0 : index
      %53 = vector.load %arg4[%c4, %c0_35, %c0_36] : memref<7x64x64xbf16, #tpu.memory_space<vmem>>, vector<1x64x64xbf16>
      %54 = vector.shape_cast %53 : vector<1x64x64xbf16> to vector<64x64xbf16>
      %cst_37 = arith.constant dense<0.000000e+00> : vector<256x64xf32>
      %55 = tpu.matmul %52, %54, %cst_37 {dimension_numbers = #tpu.dot_dimension_numbers<[1], [0], [0], [1], [0, 0, 1, 1], [], []>} : vector<256x64xbf16>, vector<64x64xbf16>, vector<256x64xf32> -> vector<256x64xf32>
      %c4_38 = arith.constant 4 : index
      %c0_39 = arith.constant 0 : index
      %c0_40 = arith.constant 0 : index
      %56 = vector.load %arg5[%c4_38, %c0_39, %c0_40] : memref<7x1x64xf32, #tpu.memory_space<vmem>>, vector<1x1x64xf32>
      %57 = vector.shape_cast %56 : vector<1x1x64xf32> to vector<1x64xf32>
      %58 = vector.broadcast %57 : vector<1x64xf32> to vector<256x64xf32>
      %59 = arith.addf %55, %58 : vector<256x64xf32>
      %cst_41 = arith.constant 0.000000e+00 : f32
      %60 = vector.broadcast %cst_41 : f32 to vector<256x64xf32>
      %61 = arith.maximumf %59, %60 : vector<256x64xf32>
      %62 = arith.truncf %61 : vector<256x64xf32> to vector<256x64xbf16>
      %c5 = arith.constant 5 : index
      %c0_42 = arith.constant 0 : index
      %c0_43 = arith.constant 0 : index
      %63 = vector.load %arg4[%c5, %c0_42, %c0_43] : memref<7x64x64xbf16, #tpu.memory_space<vmem>>, vector<1x64x64xbf16>
      %64 = vector.shape_cast %63 : vector<1x64x64xbf16> to vector<64x64xbf16>
      %cst_44 = arith.constant dense<0.000000e+00> : vector<256x64xf32>
      %65 = tpu.matmul %62, %64, %cst_44 {dimension_numbers = #tpu.dot_dimension_numbers<[1], [0], [0], [1], [0, 0, 1, 1], [], []>} : vector<256x64xbf16>, vector<64x64xbf16>, vector<256x64xf32> -> vector<256x64xf32>
      %c5_45 = arith.constant 5 : index
      %c0_46 = arith.constant 0 : index
      %c0_47 = arith.constant 0 : index
      %66 = vector.load %arg5[%c5_45, %c0_46, %c0_47] : memref<7x1x64xf32, #tpu.memory_space<vmem>>, vector<1x1x64xf32>
      %67 = vector.shape_cast %66 : vector<1x1x64xf32> to vector<1x64xf32>
      %68 = vector.broadcast %67 : vector<1x64xf32> to vector<256x64xf32>
      %69 = arith.addf %65, %68 : vector<256x64xf32>
      %cst_48 = arith.constant 0.000000e+00 : f32
      %70 = vector.broadcast %cst_48 : f32 to vector<256x64xf32>
      %71 = arith.maximumf %69, %70 : vector<256x64xf32>
      %72 = arith.truncf %71 : vector<256x64xf32> to vector<256x64xbf16>
      %c6 = arith.constant 6 : index
      %c0_49 = arith.constant 0 : index
      %c0_50 = arith.constant 0 : index
      %73 = vector.load %arg4[%c6, %c0_49, %c0_50] : memref<7x64x64xbf16, #tpu.memory_space<vmem>>, vector<1x64x64xbf16>
      %74 = vector.shape_cast %73 : vector<1x64x64xbf16> to vector<64x64xbf16>
      %cst_51 = arith.constant dense<0.000000e+00> : vector<256x64xf32>
      %75 = tpu.matmul %72, %74, %cst_51 {dimension_numbers = #tpu.dot_dimension_numbers<[1], [0], [0], [1], [0, 0, 1, 1], [], []>} : vector<256x64xbf16>, vector<64x64xbf16>, vector<256x64xf32> -> vector<256x64xf32>
      %c6_52 = arith.constant 6 : index
      %c0_53 = arith.constant 0 : index
      %c0_54 = arith.constant 0 : index
      %76 = vector.load %arg5[%c6_52, %c0_53, %c0_54] : memref<7x1x64xf32, #tpu.memory_space<vmem>>, vector<1x1x64xf32>
      %77 = vector.shape_cast %76 : vector<1x1x64xf32> to vector<1x64xf32>
      %78 = vector.broadcast %77 : vector<1x64xf32> to vector<256x64xf32>
      %79 = arith.addf %75, %78 : vector<256x64xf32>
      %cst_55 = arith.constant 0.000000e+00 : f32
      %80 = vector.broadcast %cst_55 : f32 to vector<256x64xf32>
      %81 = arith.maximumf %79, %80 : vector<256x64xf32>
      %82 = arith.truncf %81 : vector<256x64xf32> to vector<256x64xbf16>
      %c0_56 = arith.constant 0 : index
      %c0_57 = arith.constant 0 : index
      %83 = vector.load %arg6[%c0_56, %c0_57] : memref<1x64xbf16, #tpu.memory_space<vmem>>, vector<1x64xbf16>
      %cst_58 = arith.constant dense<0.000000e+00> : vector<1x256xf32>
      %84 = tpu.matmul %83, %82, %cst_58 {dimension_numbers = #tpu.dot_dimension_numbers<[1], [1], [0], [0], [0, 0, 1, 0], [], []>} : vector<1x64xbf16>, vector<256x64xbf16>, vector<1x256xf32> -> vector<1x256xf32>
      %c0_59 = arith.constant 0 : index
      %c0_60 = arith.constant 0 : index
      %85 = vector.load %arg7[%c0_59, %c0_60] : memref<1x1xf32, #tpu.memory_space<vmem>>, vector<1x1xf32>
      %86 = vector.broadcast %85 : vector<1x1xf32> to vector<1x256xf32>
      %87 = arith.addf %84, %86 : vector<1x256xf32>
      %88 = arith.negf %87 : vector<1x256xf32>
      %89 = math.exp %88 : vector<1x256xf32>
      %cst_61 = arith.constant 1.000000e+00 : f32
      %90 = vector.broadcast %cst_61 : f32 to vector<1x256xf32>
      %91 = arith.addf %90, %89 : vector<1x256xf32>
      %92 = arith.divf %90, %91 : vector<1x256xf32>
      %c0_62 = arith.constant 0 : index
      %93 = arith.index_cast %arg9 : i32 to index
      %c0_63 = arith.constant 0 : index
      %94 = vector.load %arg8[%c0_62, %93, %c0_63] : memref<1x2x256xf32, #tpu.memory_space<vmem>>, vector<1x1x256xf32>
      %95 = vector.shape_cast %94 : vector<1x1x256xf32> to vector<1x256xf32>
      %96 = vector.shape_cast %92 : vector<1x256xf32> to vector<1x1x256xf32>
      tpu.vector_store %arg8[%c0_62, %93, %c0_63], %96 {strides = array<i32>} : memref<1x2x256xf32, #tpu.memory_space<vmem>>, vector<1x1x256xf32>,
    }
    %c2_i32_0 = arith.constant 2 : i32
    return
  }
  func.func @transform_0(%arg0: i32) -> (i32, i32) {
    %c0_i32 = arith.constant 0 : i32
    %c0_i32_0 = arith.constant 0 : i32
    return %arg0, %c0_i32 : i32, i32
  }
  func.func @transform_1(%arg0: i32) -> (i32, i32) {
    %c0_i32 = arith.constant 0 : i32
    %c0_i32_0 = arith.constant 0 : i32
    %c0_i32_1 = arith.constant 0 : i32
    return %c0_i32, %c0_i32_0 : i32, i32
  }
  func.func @transform_2(%arg0: i32) -> (i32, i32) {
    %c0_i32 = arith.constant 0 : i32
    %c0_i32_0 = arith.constant 0 : i32
    %c0_i32_1 = arith.constant 0 : i32
    return %c0_i32, %c0_i32_0 : i32, i32
  }
  func.func @transform_3(%arg0: i32) -> (i32, i32, i32) {
    %c0_i32 = arith.constant 0 : i32
    %c0_i32_0 = arith.constant 0 : i32
    %c0_i32_1 = arith.constant 0 : i32
    %c0_i32_2 = arith.constant 0 : i32
    return %c0_i32, %c0_i32_0, %c0_i32_1 : i32, i32, i32
  }
  func.func @transform_4(%arg0: i32) -> (i32, i32, i32) {
    %c0_i32 = arith.constant 0 : i32
    %c0_i32_0 = arith.constant 0 : i32
    %c0_i32_1 = arith.constant 0 : i32
    %c0_i32_2 = arith.constant 0 : i32
    return %c0_i32, %c0_i32_0, %c0_i32_1 : i32, i32, i32
  }
  func.func @transform_5(%arg0: i32) -> (i32, i32) {
    %c0_i32 = arith.constant 0 : i32
    %c0_i32_0 = arith.constant 0 : i32
    %c0_i32_1 = arith.constant 0 : i32
    return %c0_i32, %c0_i32_0 : i32, i32
  }
  func.func @transform_6(%arg0: i32) -> (i32, i32) {
    %c0_i32 = arith.constant 0 : i32
    %c0_i32_0 = arith.constant 0 : i32
    %c0_i32_1 = arith.constant 0 : i32
    return %c0_i32, %c0_i32_0 : i32, i32
  }
  func.func @transform_7(%arg0: i32) -> (i32, i32, i32) {
    %c0_i32 = arith.constant 0 : i32
    %c0_i32_0 = arith.constant 0 : i32
    %c0_i32_1 = arith.constant 0 : i32
    return %arg0, %c0_i32, %c0_i32_0 : i32, i32, i32
  }
}

</mosaic_0001>

<llo_original>
// kernel: tpu_custom_call.1
$region0: #{tpu_custom_call.1}
  #allocation0 [shape = 'u32[]', space=smem, size = 0x4, offset = 0x4, fixed_abs, tag = 'smem constant byte address 0x4 - core index']
  #allocation1 [shape = 'u32[72,128]{1,0:T(1,128)}', space=vmem, size = 0x9000, scoped, tag = 'internal scratch']
  #allocation2 [shape = 'f32[1,1]{1,0:T(1,128)S(1)}', space=vmem, size = 0x200, scoped, tag = 'scoped memory for tpu_custom_call.1']
  %s0 = inlined_call_operand.vmem [shape: f32[1024,16], index: 0, kind: input, shape index: {}]
  %s1 = inlined_call_operand.vmem [shape: f32[16,64], index: 1, kind: input, shape index: {}]
  %s2 = inlined_call_operand.vmem [shape: f32[1,64], index: 2, kind: input, shape index: {}]
  %s3 = inlined_call_operand.vmem [shape: bf16[7,64,64], index: 3, kind: input, shape index: {}]
  %s4 = inlined_call_operand.vmem [shape: f32[7,1,64], index: 4, kind: input, shape index: {}]
  %s5 = inlined_call_operand.vmem [shape: bf16[1,64], index: 5, kind: input, shape index: {}]
  %s6 = inlined_call_operand.<no memory space> [shape: f32[1,1], index: 6, kind: input, shape index: {}]
  %s7 = inlined_call_operand.hbm [shape: f32[2,2,256], index: 7, kind: output, shape index: {}]
  %s8 = sld [smem:[#allocation0]]
  $region68: #{tpu_custom_call.1} parent=0
    _
  %s10 = ssub.s32 1, %s8
  %s11 = scalar_select 0, %s10, %s8
  %v12 = vstv %s6
  %13 = vst [vmem:[#allocation2] sm:$0x1] %v12
  $region1: #{tpu_custom_call.1} parent=0
    #allocation3 [shape = 'u8[4096]{0}', space=vmem, size = 0x1000, scoped, tag = 'output window, operand 0']
    #allocation4 [shape = 's32[2]{0}', space=sflag, size = 0x8, scoped, tag = 'scoped memory for tpu_custom_call.1']
    %14 = vsyncpa [#allocation4], 0
    %s15 = scalar_lea.sflag [#allocation4], 1
    %16 = vsyncpa %s15, 0
    loop: start=0, step=1, limit=4
    $region2: #{tpu_custom_call.1} parent=1 // loop_pre_header
      _
    $region3: #{tpu_custom_call.1} parent=1 // loop_header
      %s18 = sphi 0, %s22
      %p19 = scmp.ge.s32.totalorder %s18, 4
      %s28 = sphi 0, %s30
      %s31 = sphi 0, %s28
      %s32 = sphi 0, %s31
      %s48 = sphi 0, %s32
      %s52 = sphi 0, %s52
      %s54 = sphi 0, %s52
      %s55 = sphi 0, %s54
      %s69 = sphi 0, %s55
      %s73 = sphi 0, %s73
      %s75 = sphi 0, %s73
      %s76 = sphi 0, %s75
      %s90 = sphi 0, %s76
      %s94 = sphi 0, %s94
      %s96 = sphi 0, %s94
      %s97 = sphi 0, %s96
      %s111 = sphi 0, %s97
      %s115 = sphi 0, %s115
      %s117 = sphi 0, %s115
      %s118 = sphi 0, %s117
      %s132 = sphi 0, %s118
      %s136 = sphi 0, %s136
      %s138 = sphi 0, %s136
      %s139 = sphi 0, %s138
      %s153 = sphi 0, %s139
      %s157 = sphi 0, %s157
      %s159 = sphi 0, %s157
      %s160 = sphi 0, %s159
      %s174 = sphi 0, %s160
      %s180 = sphi 0, %s182
      %s183 = sphi 0, %s180
      %s184 = sphi 0, %s183
      %s200 = sphi 0, %s184
    $region4: #{tpu_custom_call.1} parent=1 // loop_header_branch
      %21 = sbr.rel (%p19) target = $region8
    $region5: #{tpu_custom_call.1} parent=1 // loop_body
      %s23 = ssub.s32 %s18, 1
      %s24 = ssub.s32 %s18, 2
      %s25 = sadd.s32 %s18, 1
      %s26 = ssub.s32 %s18, %s25
      %p27 = scmp.eq.s32.totalorder %s26, 0
      %s29 = sadd.s32 %s28, 1
      %s30 = scalar_select %p27, %s28, %s29
      %p33 = pneg %p27
      %p34 = scmp.eq.s32.totalorder %s18, 1
      %p35 = por %p33, %p34
      %p36 = scmp.ne.s32.totalorder %s28, %s31
      %p37 = scmp.eq.s32.totalorder %s18, 0
      %p38 = por %p36, %p37
      %p39 = scmp.ne.s32.totalorder %s28, %s31
      %p40 = scmp.eq.s32.totalorder %s23, 1
      %p41 = por %p39, %p40
      %p42 = scmp.ne.s32.totalorder %s31, %s32
      %p43 = scmp.eq.s32.totalorder %s23, 0
      %p44 = por %p42, %p43
      %p45 = scmp.ne.s32.totalorder %s31, %s32
      %p46 = scmp.eq.s32.totalorder %s24, 1
      %p47 = por %p45, %p46
      %p49 = scmp.ne.s32.totalorder %s32, %s48
      %p50 = scmp.eq.s32.totalorder %s24, 0
      %p51 = por %p49, %p50
      %s53 = sadd.s32 %s52, 1
      %p56 = scmp.eq.s32.totalorder %s18, 1
      %p57 = scmp.ne.s32.totalorder %s52, %s54
      %p58 = scmp.eq.s32.totalorder %s18, 0
      %p59 = por %p57, %p58
      %p60 = scmp.ne.s32.totalorder %s52, %s54
      %p61 = scmp.eq.s32.totalorder %s23, 1
      %p62 = por %p60, %p61
      %p63 = scmp.ne.s32.totalorder %s54, %s55
      %p64 = scmp.eq.s32.totalorder %s23, 0
      %p65 = por %p63, %p64
      %p66 = scmp.ne.s32.totalorder %s54, %s55
      %p67 = scmp.eq.s32.totalorder %s24, 1
      %p68 = por %p66, %p67
      %p70 = scmp.ne.s32.totalorder %s55, %s69
      %p71 = scmp.eq.s32.totalorder %s24, 0
      %p72 = por %p70, %p71
      %s74 = sadd.s32 %s73, 1
      %p77 = scmp.eq.s32.totalorder %s18, 1
      %p78 = scmp.ne.s32.totalorder %s73, %s75
      %p79 = scmp.eq.s32.totalorder %s18, 0
      %p80 = por %p78, %p79
      %p81 = scmp.ne.s32.totalorder %s73, %s75
      %p82 = scmp.eq.s32.totalorder %s23, 1
      %p83 = por %p81, %p82
      %p84 = scmp.ne.s32.totalorder %s75, %s76
      %p85 = scmp.eq.s32.totalorder %s23, 0
      %p86 = por %p84, %p85
      %p87 = scmp.ne.s32.totalorder %s75, %s76
      %p88 = scmp.eq.s32.totalorder %s24, 1
      %p89 = por %p87, %p88
      %p91 = scmp.ne.s32.totalorder %s76, %s90
      %p92 = scmp.eq.s32.totalorder %s24, 0
      %p93 = por %p91, %p92
      %s95 = sadd.s32 %s94, 1
      %p98 = scmp.eq.s32.totalorder %s18, 1
      %p99 = scmp.ne.s32.totalorder %s94, %s96
      %p100 = scmp.eq.s32.totalorder %s18, 0
      %p101 = por %p99, %p100
      %p102 = scmp.ne.s32.totalorder %s94, %s96
      %p103 = scmp.eq.s32.totalorder %s23, 1
      %p104 = por %p102, %p103
      %p105 = scmp.ne.s32.totalorder %s96, %s97
      %p106 = scmp.eq.s32.totalorder %s23, 0
      %p107 = por %p105, %p106
      %p108 = scmp.ne.s32.totalorder %s96, %s97
      %p109 = scmp.eq.s32.totalorder %s24, 1
      %p110 = por %p108, %p109
      %p112 = scmp.ne.s32.totalorder %s97, %s111
      %p113 = scmp.eq.s32.totalorder %s24, 0
      %p114 = por %p112, %p113
      %s116 = sadd.s32 %s115, 1
      %p119 = scmp.eq.s32.totalorder %s18, 1
      %p120 = scmp.ne.s32.totalorder %s115, %s117
      %p121 = scmp.eq.s32.totalorder %s18, 0
      %p122 = por %p120, %p121
      %p123 = scmp.ne.s32.totalorder %s115, %s117
      %p124 = scmp.eq.s32.totalorder %s23, 1
      %p125 = por %p123, %p124
      %p126 = scmp.ne.s32.totalorder %s117, %s118
      %p127 = scmp.eq.s32.totalorder %s23, 0
      %p128 = por %p126, %p127
      %p129 = scmp.ne.s32.totalorder %s117, %s118
      %p130 = scmp.eq.s32.totalorder %s24, 1
      %p131 = por %p129, %p130
      %p133 = scmp.ne.s32.totalorder %s118, %s132
      %p134 = scmp.eq.s32.totalorder %s24, 0
      %p135 = por %p133, %p134
      %s137 = sadd.s32 %s136, 1
      %p140 = scmp.eq.s32.totalorder %s18, 1
      %p141 = scmp.ne.s32.totalorder %s136, %s138
      %p142 = scmp.eq.s32.totalorder %s18, 0
      %p143 = por %p141, %p142
      %p144 = scmp.ne.s32.totalorder %s136, %s138
      %p145 = scmp.eq.s32.totalorder %s23, 1
      %p146 = por %p144, %p145
      %p147 = scmp.ne.s32.totalorder %s138, %s139
      %p148 = scmp.eq.s32.totalorder %s23, 0
      %p149 = por %p147, %p148
      %p150 = scmp.ne.s32.totalorder %s138, %s139
      %p151 = scmp.eq.s32.totalorder %s24, 1
      %p152 = por %p150, %p151
      %p154 = scmp.ne.s32.totalorder %s139, %s153
      %p155 = scmp.eq.s32.totalorder %s24, 0
      %p156 = por %p154, %p155
      %s158 = sadd.s32 %s157, 1
      %p161 = scmp.eq.s32.totalorder %s18, 1
      %p162 = scmp.ne.s32.totalorder %s157, %s159
      %p163 = scmp.eq.s32.totalorder %s18, 0
      %p164 = por %p162, %p163
      %p165 = scmp.ne.s32.totalorder %s157, %s159
      %p166 = scmp.eq.s32.totalorder %s23, 1
      %p167 = por %p165, %p166
      %p168 = scmp.ne.s32.totalorder %s159, %s160
      %p169 = scmp.eq.s32.totalorder %s23, 0
      %p170 = por %p168, %p169
      %p171 = scmp.ne.s32.totalorder %s159, %s160
      %p172 = scmp.eq.s32.totalorder %s24, 1
      %p173 = por %p171, %p172
      %p175 = scmp.ne.s32.totalorder %s160, %s174
      %p176 = scmp.eq.s32.totalorder %s24, 0
      %p177 = por %p175, %p176
      %s178 = ssub.s32 %s18, %s25
      %p179 = scmp.eq.s32.totalorder %s178, 0
      %s181 = sadd.s32 %s180, 1
      %s182 = scalar_select %p179, %s180, %s181
      %p185 = pneg %p179
      %p186 = scmp.eq.s32.totalorder %s18, 1
      %p187 = por %p185, %p186
      %p188 = scmp.ne.s32.totalorder %s180, %s183
      %p189 = scmp.eq.s32.totalorder %s18, 0
      %p190 = por %p188, %p189
      %p191 = scmp.ne.s32.totalorder %s180, %s183
      %p192 = scmp.eq.s32.totalorder %s23, 1
      %p193 = por %p191, %p192
      %p194 = scmp.ne.s32.totalorder %s183, %s184
      %p195 = scmp.eq.s32.totalorder %s23, 0
      %p196 = por %p194, %p195
      %p197 = scmp.ne.s32.totalorder %s183, %s184
      %p198 = scmp.eq.s32.totalorder %s24, 1
      %p199 = por %p197, %p198
      %p201 = scmp.ne.s32.totalorder %s184, %s200
      %p202 = scmp.eq.s32.totalorder %s24, 0
      %p203 = por %p201, %p202
      %p204 = scmp.le.s32.totalorder 1, %s18
      %p205 = scmp.lt.s32.totalorder %s18, 3
      %p206 = pnand %p204, %p205
      %p207 = pneg %p206
      // Predicated region
      $region9: #{tpu_custom_call.1} parent=5 // pred_check
        _
      $region10: #{tpu_custom_call.1} parent=5 // pred_check_branch
        %209 = sbr.rel (%p206) target = $region12
      $region11: #{tpu_custom_call.1} parent=5 // pred_region
        %s210 = ssub.s32 %s18, 1
        // Predicated region
        $region13: #{tpu_custom_call.1} parent=11 // pred_check
          %p211 = pneg %p65
        $region14: #{tpu_custom_call.1} parent=11 // pred_check_branch
          %213 = sbr.rel (%p211) target = $region16
        $region15: #{tpu_custom_call.1} parent=11 // pred_region
          _
        $region16: #{tpu_custom_call.1} parent=11 // pred_fallthru
          _
        // Predicated region
        $region17: #{tpu_custom_call.1} parent=11 // pred_check
          %p214 = pneg %p86
        $region18: #{tpu_custom_call.1} parent=11 // pred_check_branch
          %216 = sbr.rel (%p214) target = $region20
        $region19: #{tpu_custom_call.1} parent=11 // pred_region
          _
        $region20: #{tpu_custom_call.1} parent=11 // pred_fallthru
          _
        // Predicated region
        $region21: #{tpu_custom_call.1} parent=11 // pred_check
          %p217 = pneg %p107
        $region22: #{tpu_custom_call.1} parent=11 // pred_check_branch
          %219 = sbr.rel (%p217) target = $region24
        $region23: #{tpu_custom_call.1} parent=11 // pred_region
          _
        $region24: #{tpu_custom_call.1} parent=11 // pred_fallthru
          _
        // Predicated region
        $region25: #{tpu_custom_call.1} parent=11 // pred_check
          %p220 = pneg %p128
        $region26: #{tpu_custom_call.1} parent=11 // pred_check_branch
          %222 = sbr.rel (%p220) target = $region28
        $region27: #{tpu_custom_call.1} parent=11 // pred_region
          _
        $region28: #{tpu_custom_call.1} parent=11 // pred_fallthru
          _
        // Predicated region
        $region29: #{tpu_custom_call.1} parent=11 // pred_check
          %p223 = pneg %p149
        $region30: #{tpu_custom_call.1} parent=11 // pred_check_branch
          %225 = sbr.rel (%p223) target = $region32
        $region31: #{tpu_custom_call.1} parent=11 // pred_region
          _
        $region32: #{tpu_custom_call.1} parent=11 // pred_fallthru
          _
        // Predicated region
        $region33: #{tpu_custom_call.1} parent=11 // pred_check
          %p226 = pneg %p170
        $region34: #{tpu_custom_call.1} parent=11 // pred_check_branch
          %228 = sbr.rel (%p226) target = $region36
        $region35: #{tpu_custom_call.1} parent=11 // pred_region
          _
        $region36: #{tpu_custom_call.1} parent=11 // pred_fallthru
          _
      $region12: #{tpu_custom_call.1} parent=5 // pred_fallthru
        _
      %p229 = scmp.lt.s32.totalorder %s18, 2
      // Predicated region
      $region37: #{tpu_custom_call.1} parent=5 // pred_check
        %p230 = pneg %p229
      $region38: #{tpu_custom_call.1} parent=5 // pred_check_branch
        %232 = sbr.rel (%p230) target = $region40
      $region39: #{tpu_custom_call.1} parent=5 // pred_region
        // Predicated region
        $region41: #{tpu_custom_call.1} parent=39 // pred_check
          %p233 = pneg %p38
        $region42: #{tpu_custom_call.1} parent=39 // pred_check_branch
          %235 = sbr.rel (%p233) target = $region44
        $region43: #{tpu_custom_call.1} parent=39 // pred_region
          %s236 = smul.u32 64, %s18
          %p237 = scmp.lt.s32.totalorder %s236, 127
          %s238 = scalar_select %p237, %s236, 127
          %s239 = smul.addr %s238, 8
          %s240 = scalar_lea.vmem %s0, %s239
          %s241 = smul.u32 64, %s18
        $region44: #{tpu_custom_call.1} parent=39 // pred_fallthru
          _
      $region40: #{tpu_custom_call.1} parent=5 // pred_fallthru
        _
      %p242 = scmp.le.s32.totalorder 1, %s18
      %p243 = scmp.lt.s32.totalorder %s18, 3
      %p244 = pnand %p242, %p243
      %p245 = pneg %p244
      // Predicated region
      $region45: #{tpu_custom_call.1} parent=5 // pred_check
        _
      $region46: #{tpu_custom_call.1} parent=5 // pred_check_branch
        %247 = sbr.rel (%p244) target = $region48
      $region47: #{tpu_custom_call.1} parent=5 // pred_region
        %s248 = ssub.s32 %s18, 1
        %s249 = smul.u32 64, %s23
        %p250 = scmp.lt.s32.totalorder %s249, 127
        %s251 = scalar_select %p250, %s249, 127
        %s252 = smul.addr %s251, 8
        %s253 = scalar_lea.vmem %s0, %s252
        %p254 = pneg %p44
        %p255 = pneg %p41
        %p256 = pneg %p65
        %p257 = pneg %p62
        %p258 = pneg %p86
        %p259 = pneg %p83
        %p260 = pneg %p107
        %p261 = pneg %p104
        %p262 = pneg %p128
        %p263 = pneg %p125
        %p264 = pneg %p149
        %p265 = pneg %p146
        %p266 = pneg %p170
        %p267 = pneg %p167
        %p268 = pneg %p196
        %p269 = pneg %p193
        %s270 = sand.u32 %s183, 1
        %s271 = scalar_lea.sflag [#allocation4], %s270
        %s272 = sand.u32 %s183, 1
        %s273 = smul.addr %s272, 4
        %s274 = scalar_lea.vmem [#allocation3], %s273
        %s275 = smul.u32 64, %s23
        %p276 = scmp.lt.s32.totalorder %s275, 127
        %s277 = scalar_select %p276, %s275, 127
        %s278 = smul.addr %s277, 8
        %s279 = scalar_lea.vmem %s0, %s278
        %s280 = smul.u32 64, %s23
        loop: start=0, step=1, limit=2
        $region49: #{tpu_custom_call.1} parent=47 // loop_pre_header
          _
        $region50: #{tpu_custom_call.1} parent=47 // loop_header
          %s283 = sphi 0, %s287
          %p284 = scmp.ge.s32.totalorder %s283, 2
        $region51: #{tpu_custom_call.1} parent=47 // loop_header_branch
          %286 = sbr.rel (%p284) target = $region55
        $region52: #{tpu_custom_call.1} parent=47 // loop_body
          %s288 = smul.u32 %s283, 256
          %s289 = scalar_lea.vmem %s279, %s288
          %v290 = vld [vmem:[%s289] sm:$0xff]
          %v291 = vld [vmem:[%s289 + $0x8] sm:$0xff]
          %v292 = vld [vmem:[%s289 + $0x10] sm:$0xff]
          %v293 = vld [vmem:[%s289 + $0x18] sm:$0xff]
          %v294 = vld [vmem:[%s289 + $0x20] sm:$0xff]
          %v295 = vld [vmem:[%s289 + $0x28] sm:$0xff]
          %v296 = vld [vmem:[%s289 + $0x30] sm:$0xff]
          %v297 = vld [vmem:[%s289 + $0x38] sm:$0xff]
          %v298 = vld [vmem:[%s289 + $0x40] sm:$0xff]
          %v299 = vld [vmem:[%s289 + $0x48] sm:$0xff]
          %v300 = vld [vmem:[%s289 + $0x50] sm:$0xff]
          %v301 = vld [vmem:[%s289 + $0x58] sm:$0xff]
          %v302 = vld [vmem:[%s289 + $0x60] sm:$0xff]
          %v303 = vld [vmem:[%s289 + $0x68] sm:$0xff]
          %v304 = vld [vmem:[%s289 + $0x70] sm:$0xff]
          %v305 = vld [vmem:[%s289 + $0x78] sm:$0xff]
          %v306 = vld [vmem:[%s289 + $0x80] sm:$0xff]
          %v307 = vld [vmem:[%s289 + $0x88] sm:$0xff]
          %v308 = vld [vmem:[%s289 + $0x90] sm:$0xff]
          %v309 = vld [vmem:[%s289 + $0x98] sm:$0xff]
          %v310 = vld [vmem:[%s289 + $0xa0] sm:$0xff]
          %v311 = vld [vmem:[%s289 + $0xa8] sm:$0xff]
          %v312 = vld [vmem:[%s289 + $0xb0] sm:$0xff]
          %v313 = vld [vmem:[%s289 + $0xb8] sm:$0xff]
          %v314 = vld [vmem:[%s289 + $0xc0] sm:$0xff]
          %v315 = vld [vmem:[%s289 + $0xc8] sm:$0xff]
          %v316 = vld [vmem:[%s289 + $0xd0] sm:$0xff]
          %v317 = vld [vmem:[%s289 + $0xd8] sm:$0xff]
          %v318 = vld [vmem:[%s289 + $0xe0] sm:$0xff]
          %v319 = vld [vmem:[%s289 + $0xe8] sm:$0xff]
          %v320 = vld [vmem:[%s289 + $0xf0] sm:$0xff]
          %v321 = vld [vmem:[%s289 + $0xf8] sm:$0xff]
          %v322 = vld [vmem:[%s1] sm:$0xff]
          %v323 = vld [vmem:[%s1 + $0x8] sm:$0xff]
          %v324 = vld [vmem:[%s2] sm:$0x1]
          %v326 = vperm.slane %v324, 0
          %vm328 = vcmask 130048
          %v330 = vsel %vm328, %v290, 0
          %v333 = vsel %vm328, %v291, 0
          %v336 = vsel %vm328, %v292, 0
          %v339 = vsel %vm328, %v293, 0
          %v342 = vsel %vm328, %v294, 0
          %v345 = vsel %vm328, %v295, 0
          %v348 = vsel %vm328, %v296, 0
          %v351 = vsel %vm328, %v297, 0
          %v354 = vsel %vm328, %v298, 0
          %v357 = vsel %vm328, %v299, 0
          %v360 = vsel %vm328, %v300, 0
          %v363 = vsel %vm328, %v301, 0
          %v366 = vsel %vm328, %v302, 0
          %v369 = vsel %vm328, %v303, 0
          %v372 = vsel %vm328, %v304, 0
          %v375 = vsel %vm328, %v305, 0
          %v378 = vsel %vm328, %v306, 0
          %v381 = vsel %vm328, %v307, 0
          %v384 = vsel %vm328, %v308, 0
          %v387 = vsel %vm328, %v309, 0
          %v390 = vsel %vm328, %v310, 0
          %v393 = vsel %vm328, %v311, 0
          %v396 = vsel %vm328, %v312, 0
          %v399 = vsel %vm328, %v313, 0
          %v402 = vsel %vm328, %v314, 0
          %v405 = vsel %vm328, %v315, 0
          %v408 = vsel %vm328, %v316, 0
          %v411 = vsel %vm328, %v317, 0
          %v414 = vsel %vm328, %v318, 0
          %v417 = vsel %vm328, %v319, 0
          %v420 = vsel %vm328, %v320, 0
          %v423 = vsel %vm328, %v321, 0
          %425 = vmatpush.msra.mxu0 0.0
          %426 = vmatpush.msra.mxu0 0.0
          %427 = vmatpush.msra.mxu0 0.0
          %428 = vmatpush.msra.mxu0 0.0
          %429 = vmatpush.msra.mxu0 0.0
          %430 = vmatpush.msra.mxu0 0.0
          %431 = vmatpush.msra.mxu0 0.0
          %432 = vmatpush.msra.mxu0 0.0
          %433 = vmatpush.msra.mxu0 0.0
          %434 = vmatpush.msra.mxu0 0.0
          %435 = vmatpush.msra.mxu0 0.0
          %436 = vmatpush.msra.mxu0 0.0
          %437 = vmatpush.msra.mxu0 0.0
          %438 = vmatpush.msra.mxu0 0.0
          %439 = vmatpush.msra.mxu0 %v323
          %440 = vmatpush.msra.mxu0 %v322
          %441 = vmatmul.f32.gmra.mxu0 %v330
          %v442 = vpop.f32.mrf.mxu0
          %v443 = vadd.f32 %v326, %v442
          %444 = vmatmul.f32.gmra.mxu0 %v333
          %v445 = vpop.f32.mrf.mxu0
          %v446 = vadd.f32 %v326, %v445
          %447 = vmatmul.f32.gmra.mxu0 %v336
          %v448 = vpop.f32.mrf.mxu0
          %v449 = vadd.f32 %v326, %v448
          %450 = vmatmul.f32.gmra.mxu0 %v339
          %v451 = vpop.f32.mrf.mxu0
          %v452 = vadd.f32 %v326, %v451
          %453 = vmatmul.f32.gmra.mxu0 %v342
          %v454 = vpop.f32.mrf.mxu0
          %v455 = vadd.f32 %v326, %v454
          %456 = vmatmul.f32.gmra.mxu0 %v345
          %v457 = vpop.f32.mrf.mxu0
          %v458 = vadd.f32 %v326, %v457
          %459 = vmatmul.f32.gmra.mxu0 %v348
          %v460 = vpop.f32.mrf.mxu0
          %v461 = vadd.f32 %v326, %v460
          %462 = vmatmul.f32.gmra.mxu0 %v351
          %v463 = vpop.f32.mrf.mxu0
          %v464 = vadd.f32 %v326, %v463
          %465 = vmatmul.f32.gmra.mxu0 %v354
          %v466 = vpop.f32.mrf.mxu0
          %v467 = vadd.f32 %v326, %v466
          %468 = vmatmul.f32.gmra.mxu0 %v357
          %v469 = vpop.f32.mrf.mxu0
          %v470 = vadd.f32 %v326, %v469
          %471 = vmatmul.f32.gmra.mxu0 %v360
          %v472 = vpop.f32.mrf.mxu0
          %v473 = vadd.f32 %v326, %v472
          %474 = vmatmul.f32.gmra.mxu0 %v363
          %v475 = vpop.f32.mrf.mxu0
          %v476 = vadd.f32 %v326, %v475
          %477 = vmatmul.f32.gmra.mxu0 %v366
          %v478 = vpop.f32.mrf.mxu0
          %v479 = vadd.f32 %v326, %v478
          %480 = vmatmul.f32.gmra.mxu0 %v369
          %v481 = vpop.f32.mrf.mxu0
          %v482 = vadd.f32 %v326, %v481
          %483 = vmatmul.f32.gmra.mxu0 %v372
          %v484 = vpop.f32.mrf.mxu0
          %v485 = vadd.f32 %v326, %v484
          %486 = vmatmul.f32.gmra.mxu0 %v375
          %v487 = vpop.f32.mrf.mxu0
          %v488 = vadd.f32 %v326, %v487
          %489 = vmatmul.f32.gmra.mxu0 %v378
          %v490 = vpop.f32.mrf.mxu0
          %v491 = vadd.f32 %v326, %v490
          %492 = vmatmul.f32.gmra.mxu0 %v381
          %v493 = vpop.f32.mrf.mxu0
          %v494 = vadd.f32 %v326, %v493
          %495 = vmatmul.f32.gmra.mxu0 %v384
          %v496 = vpop.f32.mrf.mxu0
          %v497 = vadd.f32 %v326, %v496
          %498 = vmatmul.f32.gmra.mxu0 %v387
          %v499 = vpop.f32.mrf.mxu0
          %v500 = vadd.f32 %v326, %v499
          %501 = vmatmul.f32.gmra.mxu0 %v390
          %v502 = vpop.f32.mrf.mxu0
          %v503 = vadd.f32 %v326, %v502
          %504 = vmatmul.f32.gmra.mxu0 %v393
          %v505 = vpop.f32.mrf.mxu0
          %v506 = vadd.f32 %v326, %v505
          %507 = vmatmul.f32.gmra.mxu0 %v396
          %v508 = vpop.f32.mrf.mxu0
          %v509 = vadd.f32 %v326, %v508
          %510 = vmatmul.f32.gmra.mxu0 %v399
          %v511 = vpop.f32.mrf.mxu0
          %v512 = vadd.f32 %v326, %v511
          %513 = vmatmul.f32.gmra.mxu0 %v402
          %v514 = vpop.f32.mrf.mxu0
          %v515 = vadd.f32 %v326, %v514
          %516 = vmatmul.f32.gmra.mxu0 %v405
          %v517 = vpop.f32.mrf.mxu0
          %v518 = vadd.f32 %v326, %v517
          %519 = vmatmul.f32.gmra.mxu0 %v408
          %v520 = vpop.f32.mrf.mxu0
          %v521 = vadd.f32 %v326, %v520
          %522 = vmatmul.f32.gmra.mxu0 %v411
          %v523 = vpop.f32.mrf.mxu0
          %v524 = vadd.f32 %v326, %v523
          %525 = vmatmul.f32.gmra.mxu0 %v414
          %v526 = vpop.f32.mrf.mxu0
          %v527 = vadd.f32 %v326, %v526
          %528 = vmatmul.f32.gmra.mxu0 %v417
          %v529 = vpop.f32.mrf.mxu0
          %v530 = vadd.f32 %v326, %v529
          %531 = vmatmul.f32.gmra.mxu0 %v420
          %v532 = vpop.f32.mrf.mxu0
          %v533 = vadd.f32 %v326, %v532
          %534 = vmatmul.f32.gmra.mxu0 %v423
          %v535 = vpop.f32.mrf.mxu0
          %v536 = vadd.f32 %v326, %v535
          %537 = vdwg.mxu0
          %v538 = vmax.f32 %v443, 0.0
          %v539 = vmax.f32 %v446, 0.0
          %v540 = vmax.f32 %v449, 0.0
          %v541 = vmax.f32 %v452, 0.0
          %v542 = vmax.f32 %v455, 0.0
          %v543 = vmax.f32 %v458, 0.0
          %v544 = vmax.f32 %v461, 0.0
          %v545 = vmax.f32 %v464, 0.0
          %v546 = vmax.f32 %v467, 0.0
          %v547 = vmax.f32 %v470, 0.0
          %v548 = vmax.f32 %v473, 0.0
          %v549 = vmax.f32 %v476, 0.0
          %v550 = vmax.f32 %v479, 0.0
          %v551 = vmax.f32 %v482, 0.0
          %v552 = vmax.f32 %v485, 0.0
          %v553 = vmax.f32 %v488, 0.0
          %v554 = vmax.f32 %v491, 0.0
          %v555 = vmax.f32 %v494, 0.0
          %v556 = vmax.f32 %v497, 0.0
          %v557 = vmax.f32 %v500, 0.0
          %v558 = vmax.f32 %v503, 0.0
          %v559 = vmax.f32 %v506, 0.0
          %v560 = vmax.f32 %v509, 0.0
          %v561 = vmax.f32 %v512, 0.0
          %v562 = vmax.f32 %v515, 0.0
          %v563 = vmax.f32 %v518, 0.0
          %v564 = vmax.f32 %v521, 0.0
          %v565 = vmax.f32 %v524, 0.0
          %v566 = vmax.f32 %v527, 0.0
          %v567 = vmax.f32 %v530, 0.0
          %v568 = vmax.f32 %v533, 0.0
          %v569 = vmax.f32 %v536, 0.0
          %v570 = vpack.c.bf16 %v539, %v538
          %v571 = vpack.c.bf16 %v541, %v540
          %v572 = vpack.c.bf16 %v543, %v542
          %v573 = vpack.c.bf16 %v545, %v544
          %v574 = vpack.c.bf16 %v547, %v546
          %v575 = vpack.c.bf16 %v549, %v548
          %v576 = vpack.c.bf16 %v551, %v550
          %v577 = vpack.c.bf16 %v553, %v552
          %v578 = vpack.c.bf16 %v555, %v554
          %v579 = vpack.c.bf16 %v557, %v556
          %v580 = vpack.c.bf16 %v559, %v558
          %v581 = vpack.c.bf16 %v561, %v560
          %v582 = vpack.c.bf16 %v563, %v562
          %v583 = vpack.c.bf16 %v565, %v564
          %v584 = vpack.c.bf16 %v567, %v566
          %v585 = vpack.c.bf16 %v569, %v568
          %v586 = vld [vmem:[%s3] sm:$0xf]
          %v587 = vld [vmem:[%s3 + $0x4] sm:$0xf]
          %v588 = vld [vmem:[%s3 + $0x8] sm:$0xf]
          %v589 = vld [vmem:[%s3 + $0xc] sm:$0xf]
          %v590 = vld [vmem:[%s3 + $0x10] sm:$0xf]
          %v591 = vld [vmem:[%s3 + $0x14] sm:$0xf]
          %v592 = vld [vmem:[%s3 + $0x18] sm:$0xf]
          %v593 = vld [vmem:[%s3 + $0x1c] sm:$0xf]
          %v594 = vld [vmem:[%s4] sm:$0x1]
          %v596 = vperm.slane %v594, 0
          %v606 = vunpack.c.l.b16 %v586
          %v607 = vunpack.c.l.b16 %v587
          %v608 = vunpack.c.l.b16 %v588
          %v609 = vunpack.c.l.b16 %v589
          %v610 = vunpack.c.l.b16 %v590
          %v611 = vunpack.c.l.b16 %v591
          %v612 = vunpack.c.l.b16 %v592
          %v613 = vunpack.c.l.b16 %v593
          %v614 = vpack.c.b16 %v607, %v606
          %v615 = vpack.c.b16 %v609, %v608
          %v616 = vpack.c.b16 %v611, %v610
          %v617 = vpack.c.b16 %v613, %v612
          %vm622 = vcmask 523264
          %v624 = vsel %vm622, %v570, 0
          %v627 = vsel %vm622, %v571, 0
          %v630 = vsel %vm622, %v572, 0
          %v633 = vsel %vm622, %v573, 0
          %v636 = vsel %vm622, %v574, 0
          %v639 = vsel %vm622, %v575, 0
          %v642 = vsel %vm622, %v576, 0
          %v645 = vsel %vm622, %v577, 0
          %v648 = vsel %vm622, %v578, 0
          %v651 = vsel %vm622, %v579, 0
          %v654 = vsel %vm622, %v580, 0
          %v657 = vsel %vm622, %v581, 0
          %v660 = vsel %vm622, %v582, 0
          %v663 = vsel %vm622, %v583, 0
          %v666 = vsel %vm622, %v584, 0
          %v669 = vsel %vm622, %v585, 0
          %671 = vmatpush.bf16.msra.mxu0 0
          %672 = vmatpush.bf16.msra.mxu0 0
          %673 = vmatpush.bf16.msra.mxu0 0
          %674 = vmatpush.bf16.msra.mxu0 0
          %675 = vmatpush.bf16.msra.mxu0 %v617
          %676 = vmatpush.bf16.msra.mxu0 %v616
          %677 = vmatpush.bf16.msra.mxu0 %v615
          %678 = vmatpush.bf16.msra.mxu0 %v614
          %679 = vmatmul.bf16.gmra.mxu0 %v624
          %v680 = vpop.f32.mrf.mxu0
          %v681 = vadd.f32 %v596, %v680
          %v682 = vpop.f32.mrf.mxu0
          %v683 = vadd.f32 %v596, %v682
          %684 = vmatmul.bf16.gmra.mxu0 %v627
          %v685 = vpop.f32.mrf.mxu0
          %v686 = vadd.f32 %v596, %v685
          %v687 = vpop.f32.mrf.mxu0
          %v688 = vadd.f32 %v596, %v687
          %689 = vmatmul.bf16.gmra.mxu0 %v630
          %v690 = vpop.f32.mrf.mxu0
          %v691 = vadd.f32 %v596, %v690
          %v692 = vpop.f32.mrf.mxu0
          %v693 = vadd.f32 %v596, %v692
          %694 = vmatmul.bf16.gmra.mxu0 %v633
          %v695 = vpop.f32.mrf.mxu0
          %v696 = vadd.f32 %v596, %v695
          %v697 = vpop.f32.mrf.mxu0
          %v698 = vadd.f32 %v596, %v697
          %699 = vmatmul.bf16.gmra.mxu0 %v636
          %v700 = vpop.f32.mrf.mxu0
          %v701 = vadd.f32 %v596, %v700
          %v702 = vpop.f32.mrf.mxu0
          %v703 = vadd.f32 %v596, %v702
          %704 = vmatmul.bf16.gmra.mxu0 %v639
          %v705 = vpop.f32.mrf.mxu0
          %v706 = vadd.f32 %v596, %v705
          %v707 = vpop.f32.mrf.mxu0
          %v708 = vadd.f32 %v596, %v707
          %709 = vmatmul.bf16.gmra.mxu0 %v642
          %v710 = vpop.f32.mrf.mxu0
          %v711 = vadd.f32 %v596, %v710
          %v712 = vpop.f32.mrf.mxu0
          %v713 = vadd.f32 %v596, %v712
          %714 = vmatmul.bf16.gmra.mxu0 %v645
          %v715 = vpop.f32.mrf.mxu0
          %v716 = vadd.f32 %v596, %v715
          %v717 = vpop.f32.mrf.mxu0
          %v718 = vadd.f32 %v596, %v717
          %719 = vmatmul.bf16.gmra.mxu0 %v648
          %v720 = vpop.f32.mrf.mxu0
          %v721 = vadd.f32 %v596, %v720
          %v722 = vpop.f32.mrf.mxu0
          %v723 = vadd.f32 %v596, %v722
          %724 = vmatmul.bf16.gmra.mxu0 %v651
          %v725 = vpop.f32.mrf.mxu0
          %v726 = vadd.f32 %v596, %v725
          %v727 = vpop.f32.mrf.mxu0
          %v728 = vadd.f32 %v596, %v727
          %729 = vmatmul.bf16.gmra.mxu0 %v654
          %v730 = vpop.f32.mrf.mxu0
          %v731 = vadd.f32 %v596, %v730
          %v732 = vpop.f32.mrf.mxu0
          %v733 = vadd.f32 %v596, %v732
          %734 = vmatmul.bf16.gmra.mxu0 %v657
          %v735 = vpop.f32.mrf.mxu0
          %v736 = vadd.f32 %v596, %v735
          %v737 = vpop.f32.mrf.mxu0
          %v738 = vadd.f32 %v596, %v737
          %739 = vmatmul.bf16.gmra.mxu0 %v660
          %v740 = vpop.f32.mrf.mxu0
          %v741 = vadd.f32 %v596, %v740
          %v742 = vpop.f32.mrf.mxu0
          %v743 = vadd.f32 %v596, %v742
          %744 = vmatmul.bf16.gmra.mxu0 %v663
          %v745 = vpop.f32.mrf.mxu0
          %v746 = vadd.f32 %v596, %v745
          %v747 = vpop.f32.mrf.mxu0
          %v748 = vadd.f32 %v596, %v747
          %749 = vmatmul.bf16.gmra.mxu0 %v666
          %v750 = vpop.f32.mrf.mxu0
          %v751 = vadd.f32 %v596, %v750
          %v752 = vpop.f32.mrf.mxu0
          %v753 = vadd.f32 %v596, %v752
          %754 = vmatmul.bf16.gmra.mxu0 %v669
          %v755 = vpop.f32.mrf.mxu0
          %v756 = vadd.f32 %v596, %v755
          %v757 = vpop.f32.mrf.mxu0
          %v758 = vadd.f32 %v596, %v757
          %759 = vdwg.mxu0
          %v760 = vmax.f32 %v681, 0.0
          %v761 = vmax.f32 %v683, 0.0
          %v762 = vmax.f32 %v686, 0.0
          %v763 = vmax.f32 %v688, 0.0
          %v764 = vmax.f32 %v691, 0.0
          %v765 = vmax.f32 %v693, 0.0
          %v766 = vmax.f32 %v696, 0.0
          %v767 = vmax.f32 %v698, 0.0
          %v768 = vmax.f32 %v701, 0.0
          %v769 = vmax.f32 %v703, 0.0
          %v770 = vmax.f32 %v706, 0.0
          %v771 = vmax.f32 %v708, 0.0
          %v772 = vmax.f32 %v711, 0.0
          %v773 = vmax.f32 %v713, 0.0
          %v774 = vmax.f32 %v716, 0.0
          %v775 = vmax.f32 %v718, 0.0
          %v776 = vmax.f32 %v721, 0.0
          %v777 = vmax.f32 %v723, 0.0
          %v778 = vmax.f32 %v726, 0.0
          %v779 = vmax.f32 %v728, 0.0
          %v780 = vmax.f32 %v731, 0.0
          %v781 = vmax.f32 %v733, 0.0
          %v782 = vmax.f32 %v736, 0.0
          %v783 = vmax.f32 %v738, 0.0
          %v784 = vmax.f32 %v741, 0.0
          %v785 = vmax.f32 %v743, 0.0
          %v786 = vmax.f32 %v746, 0.0
          %v787 = vmax.f32 %v748, 0.0
          %v788 = vmax.f32 %v751, 0.0
          %v789 = vmax.f32 %v753, 0.0
          %v790 = vmax.f32 %v756, 0.0
          %v791 = vmax.f32 %v758, 0.0
          %v792 = vpack.c.bf16 %v761, %v760
          %v793 = vpack.c.bf16 %v763, %v762
          %v794 = vpack.c.bf16 %v765, %v764
          %v795 = vpack.c.bf16 %v767, %v766
          %v796 = vpack.c.bf16 %v769, %v768
          %v797 = vpack.c.bf16 %v771, %v770
          %v798 = vpack.c.bf16 %v773, %v772
          %v799 = vpack.c.bf16 %v775, %v774
          %v800 = vpack.c.bf16 %v777, %v776
          %v801 = vpack.c.bf16 %v779, %v778
          %v802 = vpack.c.bf16 %v781, %v780
          %v803 = vpack.c.bf16 %v783, %v782
          %v804 = vpack.c.bf16 %v785, %v784
          %v805 = vpack.c.bf16 %v787, %v786
          %v806 = vpack.c.bf16 %v789, %v788
          %v807 = vpack.c.bf16 %v791, %v790
          %s808 = scalar_lea.vmem %s3, 32
          %v809 = vld [vmem:[%s808] sm:$0xf]
          %v810 = vld [vmem:[%s808 + $0x4] sm:$0xf]
          %v811 = vld [vmem:[%s808 + $0x8] sm:$0xf]
          %v812 = vld [vmem:[%s808 + $0xc] sm:$0xf]
          %v813 = vld [vmem:[%s808 + $0x10] sm:$0xf]
          %v814 = vld [vmem:[%s808 + $0x14] sm:$0xf]
          %v815 = vld [vmem:[%s808 + $0x18] sm:$0xf]
          %v816 = vld [vmem:[%s808 + $0x1c] sm:$0xf]
          %s817 = scalar_lea.vmem %s4, 1
          %v818 = vld [vmem:[%s817] sm:$0x1]
          %v820 = vperm.slane %v818, 0
          %v830 = vunpack.c.l.b16 %v809
          %v831 = vunpack.c.l.b16 %v810
          %v832 = vunpack.c.l.b16 %v811
          %v833 = vunpack.c.l.b16 %v812
          %v834 = vunpack.c.l.b16 %v813
          %v835 = vunpack.c.l.b16 %v814
          %v836 = vunpack.c.l.b16 %v815
          %v837 = vunpack.c.l.b16 %v816
          %v838 = vpack.c.b16 %v831, %v830
          %v839 = vpack.c.b16 %v833, %v832
          %v840 = vpack.c.b16 %v835, %v834
          %v841 = vpack.c.b16 %v837, %v836
          %v847 = vsel %vm622, %v792, 0
          %v850 = vsel %vm622, %v793, 0
          %v853 = vsel %vm622, %v794, 0
          %v856 = vsel %vm622, %v795, 0
          %v859 = vsel %vm622, %v796, 0
          %v862 = vsel %vm622, %v797, 0
          %v865 = vsel %vm622, %v798, 0
          %v868 = vsel %vm622, %v799, 0
          %v871 = vsel %vm622, %v800, 0
          %v874 = vsel %vm622, %v801, 0
          %v877 = vsel %vm622, %v802, 0
          %v880 = vsel %vm622, %v803, 0
          %v883 = vsel %vm622, %v804, 0
          %v886 = vsel %vm622, %v805, 0
          %v889 = vsel %vm622, %v806, 0
          %v892 = vsel %vm622, %v807, 0
          %894 = vmatpush.bf16.msra.mxu0 0
          %895 = vmatpush.bf16.msra.mxu0 0
          %896 = vmatpush.bf16.msra.mxu0 0
          %897 = vmatpush.bf16.msra.mxu0 0
          %898 = vmatpush.bf16.msra.mxu0 %v841
          %899 = vmatpush.bf16.msra.mxu0 %v840
          %900 = vmatpush.bf16.msra.mxu0 %v839
          %901 = vmatpush.bf16.msra.mxu0 %v838
          %902 = vmatmul.bf16.gmra.mxu0 %v847
          %v903 = vpop.f32.mrf.mxu0
          %v904 = vadd.f32 %v820, %v903
          %v905 = vpop.f32.mrf.mxu0
          %v906 = vadd.f32 %v820, %v905
          %907 = vmatmul.bf16.gmra.mxu0 %v850
          %v908 = vpop.f32.mrf.mxu0
          %v909 = vadd.f32 %v820, %v908
          %v910 = vpop.f32.mrf.mxu0
          %v911 = vadd.f32 %v820, %v910
          %912 = vmatmul.bf16.gmra.mxu0 %v853
          %v913 = vpop.f32.mrf.mxu0
          %v914 = vadd.f32 %v820, %v913
          %v915 = vpop.f32.mrf.mxu0
          %v916 = vadd.f32 %v820, %v915
          %917 = vmatmul.bf16.gmra.mxu0 %v856
          %v918 = vpop.f32.mrf.mxu0
          %v919 = vadd.f32 %v820, %v918
          %v920 = vpop.f32.mrf.mxu0
          %v921 = vadd.f32 %v820, %v920
          %922 = vmatmul.bf16.gmra.mxu0 %v859
          %v923 = vpop.f32.mrf.mxu0
          %v924 = vadd.f32 %v820, %v923
          %v925 = vpop.f32.mrf.mxu0
          %v926 = vadd.f32 %v820, %v925
          %927 = vmatmul.bf16.gmra.mxu0 %v862
          %v928 = vpop.f32.mrf.mxu0
          %v929 = vadd.f32 %v820, %v928
          %v930 = vpop.f32.mrf.mxu0
          %v931 = vadd.f32 %v820, %v930
          %932 = vmatmul.bf16.gmra.mxu0 %v865
          %v933 = vpop.f32.mrf.mxu0
          %v934 = vadd.f32 %v820, %v933
          %v935 = vpop.f32.mrf.mxu0
          %v936 = vadd.f32 %v820, %v935
          %937 = vmatmul.bf16.gmra.mxu0 %v868
          %v938 = vpop.f32.mrf.mxu0
          %v939 = vadd.f32 %v820, %v938
          %v940 = vpop.f32.mrf.mxu0
          %v941 = vadd.f32 %v820, %v940
          %942 = vmatmul.bf16.gmra.mxu0 %v871
          %v943 = vpop.f32.mrf.mxu0
          %v944 = vadd.f32 %v820, %v943
          %v945 = vpop.f32.mrf.mxu0
          %v946 = vadd.f32 %v820, %v945
          %947 = vmatmul.bf16.gmra.mxu0 %v874
          %v948 = vpop.f32.mrf.mxu0
          %v949 = vadd.f32 %v820, %v948
          %v950 = vpop.f32.mrf.mxu0
          %v951 = vadd.f32 %v820, %v950
          %952 = vmatmul.bf16.gmra.mxu0 %v877
          %v953 = vpop.f32.mrf.mxu0
          %v954 = vadd.f32 %v820, %v953
          %v955 = vpop.f32.mrf.mxu0
          %v956 = vadd.f32 %v820, %v955
          %957 = vmatmul.bf16.gmra.mxu0 %v880
          %v958 = vpop.f32.mrf.mxu0
          %v959 = vadd.f32 %v820, %v958
          %v960 = vpop.f32.mrf.mxu0
          %v961 = vadd.f32 %v820, %v960
          %962 = vmatmul.bf16.gmra.mxu0 %v883
          %v963 = vpop.f32.mrf.mxu0
          %v964 = vadd.f32 %v820, %v963
          %v965 = vpop.f32.mrf.mxu0
          %v966 = vadd.f32 %v820, %v965
          %967 = vmatmul.bf16.gmra.mxu0 %v886
          %v968 = vpop.f32.mrf.mxu0
          %v969 = vadd.f32 %v820, %v968
          %v970 = vpop.f32.mrf.mxu0
          %v971 = vadd.f32 %v820, %v970
          %972 = vmatmul.bf16.gmra.mxu0 %v889
          %v973 = vpop.f32.mrf.mxu0
          %v974 = vadd.f32 %v820, %v973
          %v975 = vpop.f32.mrf.mxu0
          %v976 = vadd.f32 %v820, %v975
          %977 = vmatmul.bf16.gmra.mxu0 %v892
          %v978 = vpop.f32.mrf.mxu0
          %v979 = vadd.f32 %v820, %v978
          %v980 = vpop.f32.mrf.mxu0
          %v981 = vadd.f32 %v820, %v980
          %982 = vdwg.mxu0
          %v983 = vmax.f32 %v904, 0.0
          %v984 = vmax.f32 %v906, 0.0
          %v985 = vmax.f32 %v909, 0.0
          %v986 = vmax.f32 %v911, 0.0
          %v987 = vmax.f32 %v914, 0.0
          %v988 = vmax.f32 %v916, 0.0
          %v989 = vmax.f32 %v919, 0.0
          %v990 = vmax.f32 %v921, 0.0
          %v991 = vmax.f32 %v924, 0.0
          %v992 = vmax.f32 %v926, 0.0
          %v993 = vmax.f32 %v929, 0.0
          %v994 = vmax.f32 %v931, 0.0
          %v995 = vmax.f32 %v934, 0.0
          %v996 = vmax.f32 %v936, 0.0
          %v997 = vmax.f32 %v939, 0.0
          %v998 = vmax.f32 %v941, 0.0
          %v999 = vmax.f32 %v944, 0.0
          %v1000 = vmax.f32 %v946, 0.0
          %v1001 = vmax.f32 %v949, 0.0
          %v1002 = vmax.f32 %v951, 0.0
          %v1003 = vmax.f32 %v954, 0.0
          %v1004 = vmax.f32 %v956, 0.0
          %v1005 = vmax.f32 %v959, 0.0
          %v1006 = vmax.f32 %v961, 0.0
          %v1007 = vmax.f32 %v964, 0.0
          %v1008 = vmax.f32 %v966, 0.0
          %v1009 = vmax.f32 %v969, 0.0
          %v1010 = vmax.f32 %v971, 0.0
          %v1011 = vmax.f32 %v974, 0.0
          %v1012 = vmax.f32 %v976, 0.0
          %v1013 = vmax.f32 %v979, 0.0
          %v1014 = vmax.f32 %v981, 0.0
          %v1015 = vpack.c.bf16 %v984, %v983
          %v1016 = vpack.c.bf16 %v986, %v985
          %v1017 = vpack.c.bf16 %v988, %v987
          %v1018 = vpack.c.bf16 %v990, %v989
          %v1019 = vpack.c.bf16 %v992, %v991
          %v1020 = vpack.c.bf16 %v994, %v993
          %v1021 = vpack.c.bf16 %v996, %v995
          %v1022 = vpack.c.bf16 %v998, %v997
          %v1023 = vpack.c.bf16 %v1000, %v999
          %v1024 = vpack.c.bf16 %v1002, %v1001
          %v1025 = vpack.c.bf16 %v1004, %v1003
          %v1026 = vpack.c.bf16 %v1006, %v1005
          %v1027 = vpack.c.bf16 %v1008, %v1007
          %v1028 = vpack.c.bf16 %v1010, %v1009
          %v1029 = vpack.c.bf16 %v1012, %v1011
          %v1030 = vpack.c.bf16 %v1014, %v1013
          %s1031 = scalar_lea.vmem %s3, 64
          %v1032 = vld [vmem:[%s1031] sm:$0xf]
          %v1033 = vld [vmem:[%s1031 + $0x4] sm:$0xf]
          %v1034 = vld [vmem:[%s1031 + $0x8] sm:$0xf]
          %v1035 = vld [vmem:[%s1031 + $0xc] sm:$0xf]
          %v1036 = vld [vmem:[%s1031 + $0x10] sm:$0xf]
          %v1037 = vld [vmem:[%s1031 + $0x14] sm:$0xf]
          %v1038 = vld [vmem:[%s1031 + $0x18] sm:$0xf]
          %v1039 = vld [vmem:[%s1031 + $0x1c] sm:$0xf]
          %s1040 = scalar_lea.vmem %s4, 2
          %v1041 = vld [vmem:[%s1040] sm:$0x1]
          %v1043 = vperm.slane %v1041, 0
          %v1053 = vunpack.c.l.b16 %v1032
          %v1054 = vunpack.c.l.b16 %v1033
          %v1055 = vunpack.c.l.b16 %v1034
          %v1056 = vunpack.c.l.b16 %v1035
          %v1057 = vunpack.c.l.b16 %v1036
          %v1058 = vunpack.c.l.b16 %v1037
          %v1059 = vunpack.c.l.b16 %v1038
          %v1060 = vunpack.c.l.b16 %v1039
          %v1061 = vpack.c.b16 %v1054, %v1053
          %v1062 = vpack.c.b16 %v1056, %v1055
          %v1063 = vpack.c.b16 %v1058, %v1057
          %v1064 = vpack.c.b16 %v1060, %v1059
          %v1070 = vsel %vm622, %v1015, 0
          %v1073 = vsel %vm622, %v1016, 0
          %v1076 = vsel %vm622, %v1017, 0
          %v1079 = vsel %vm622, %v1018, 0
          %v1082 = vsel %vm622, %v1019, 0
          %v1085 = vsel %vm622, %v1020, 0
          %v1088 = vsel %vm622, %v1021, 0
          %v1091 = vsel %vm622, %v1022, 0
          %v1094 = vsel %vm622, %v1023, 0
          %v1097 = vsel %vm622, %v1024, 0
          %v1100 = vsel %vm622, %v1025, 0
          %v1103 = vsel %vm622, %v1026, 0
          %v1106 = vsel %vm622, %v1027, 0
          %v1109 = vsel %vm622, %v1028, 0
          %v1112 = vsel %vm622, %v1029, 0
          %v1115 = vsel %vm622, %v1030, 0
          %1117 = vmatpush.bf16.msra.mxu0 0
          %1118 = vmatpush.bf16.msra.mxu0 0
          %1119 = vmatpush.bf16.msra.mxu0 0
          %1120 = vmatpush.bf16.msra.mxu0 0
          %1121 = vmatpush.bf16.msra.mxu0 %v1064
          %1122 = vmatpush.bf16.msra.mxu0 %v1063
          %1123 = vmatpush.bf16.msra.mxu0 %v1062
          %1124 = vmatpush.bf16.msra.mxu0 %v1061
          %1125 = vmatmul.bf16.gmra.mxu0 %v1070
          %v1126 = vpop.f32.mrf.mxu0
          %v1127 = vadd.f32 %v1043, %v1126
          %v1128 = vpop.f32.mrf.mxu0
          %v1129 = vadd.f32 %v1043, %v1128
          %1130 = vmatmul.bf16.gmra.mxu0 %v1073
          %v1131 = vpop.f32.mrf.mxu0
          %v1132 = vadd.f32 %v1043, %v1131
          %v1133 = vpop.f32.mrf.mxu0
          %v1134 = vadd.f32 %v1043, %v1133
          %1135 = vmatmul.bf16.gmra.mxu0 %v1076
          %v1136 = vpop.f32.mrf.mxu0
          %v1137 = vadd.f32 %v1043, %v1136
          %v1138 = vpop.f32.mrf.mxu0
          %v1139 = vadd.f32 %v1043, %v1138
          %1140 = vmatmul.bf16.gmra.mxu0 %v1079
          %v1141 = vpop.f32.mrf.mxu0
          %v1142 = vadd.f32 %v1043, %v1141
          %v1143 = vpop.f32.mrf.mxu0
          %v1144 = vadd.f32 %v1043, %v1143
          %1145 = vmatmul.bf16.gmra.mxu0 %v1082
          %v1146 = vpop.f32.mrf.mxu0
          %v1147 = vadd.f32 %v1043, %v1146
          %v1148 = vpop.f32.mrf.mxu0
          %v1149 = vadd.f32 %v1043, %v1148
          %1150 = vmatmul.bf16.gmra.mxu0 %v1085
          %v1151 = vpop.f32.mrf.mxu0
          %v1152 = vadd.f32 %v1043, %v1151
          %v1153 = vpop.f32.mrf.mxu0
          %v1154 = vadd.f32 %v1043, %v1153
          %1155 = vmatmul.bf16.gmra.mxu0 %v1088
          %v1156 = vpop.f32.mrf.mxu0
          %v1157 = vadd.f32 %v1043, %v1156
          %v1158 = vpop.f32.mrf.mxu0
          %v1159 = vadd.f32 %v1043, %v1158
          %1160 = vmatmul.bf16.gmra.mxu0 %v1091
          %v1161 = vpop.f32.mrf.mxu0
          %v1162 = vadd.f32 %v1043, %v1161
          %v1163 = vpop.f32.mrf.mxu0
          %v1164 = vadd.f32 %v1043, %v1163
          %1165 = vmatmul.bf16.gmra.mxu0 %v1094
          %v1166 = vpop.f32.mrf.mxu0
          %v1167 = vadd.f32 %v1043, %v1166
          %v1168 = vpop.f32.mrf.mxu0
          %v1169 = vadd.f32 %v1043, %v1168
          %1170 = vmatmul.bf16.gmra.mxu0 %v1097
          %v1171 = vpop.f32.mrf.mxu0
          %v1172 = vadd.f32 %v1043, %v1171
          %v1173 = vpop.f32.mrf.mxu0
          %v1174 = vadd.f32 %v1043, %v1173
          %1175 = vmatmul.bf16.gmra.mxu0 %v1100
          %v1176 = vpop.f32.mrf.mxu0
          %v1177 = vadd.f32 %v1043, %v1176
          %v1178 = vpop.f32.mrf.mxu0
          %v1179 = vadd.f32 %v1043, %v1178
          %1180 = vmatmul.bf16.gmra.mxu0 %v1103
          %v1181 = vpop.f32.mrf.mxu0
          %v1182 = vadd.f32 %v1043, %v1181
          %v1183 = vpop.f32.mrf.mxu0
          %v1184 = vadd.f32 %v1043, %v1183
          %1185 = vmatmul.bf16.gmra.mxu0 %v1106
          %v1186 = vpop.f32.mrf.mxu0
          %v1187 = vadd.f32 %v1043, %v1186
          %v1188 = vpop.f32.mrf.mxu0
          %v1189 = vadd.f32 %v1043, %v1188
          %1190 = vmatmul.bf16.gmra.mxu0 %v1109
          %v1191 = vpop.f32.mrf.mxu0
          %v1192 = vadd.f32 %v1043, %v1191
          %v1193 = vpop.f32.mrf.mxu0
          %v1194 = vadd.f32 %v1043, %v1193
          %1195 = vmatmul.bf16.gmra.mxu0 %v1112
          %v1196 = vpop.f32.mrf.mxu0
          %v1197 = vadd.f32 %v1043, %v1196
          %v1198 = vpop.f32.mrf.mxu0
          %v1199 = vadd.f32 %v1043, %v1198
          %1200 = vmatmul.bf16.gmra.mxu0 %v1115
          %v1201 = vpop.f32.mrf.mxu0
          %v1202 = vadd.f32 %v1043, %v1201
          %v1203 = vpop.f32.mrf.mxu0
          %v1204 = vadd.f32 %v1043, %v1203
          %1205 = vdwg.mxu0
          %v1206 = vmax.f32 %v1127, 0.0
          %v1207 = vmax.f32 %v1129, 0.0
          %v1208 = vmax.f32 %v1132, 0.0
          %v1209 = vmax.f32 %v1134, 0.0
          %v1210 = vmax.f32 %v1137, 0.0
          %v1211 = vmax.f32 %v1139, 0.0
          %v1212 = vmax.f32 %v1142, 0.0
          %v1213 = vmax.f32 %v1144, 0.0
          %v1214 = vmax.f32 %v1147, 0.0
          %v1215 = vmax.f32 %v1149, 0.0
          %v1216 = vmax.f32 %v1152, 0.0
          %v1217 = vmax.f32 %v1154, 0.0
          %v1218 = vmax.f32 %v1157, 0.0
          %v1219 = vmax.f32 %v1159, 0.0
          %v1220 = vmax.f32 %v1162, 0.0
          %v1221 = vmax.f32 %v1164, 0.0
          %v1222 = vmax.f32 %v1167, 0.0
          %v1223 = vmax.f32 %v1169, 0.0
          %v1224 = vmax.f32 %v1172, 0.0
          %v1225 = vmax.f32 %v1174, 0.0
          %v1226 = vmax.f32 %v1177, 0.0
          %v1227 = vmax.f32 %v1179, 0.0
          %v1228 = vmax.f32 %v1182, 0.0
          %v1229 = vmax.f32 %v1184, 0.0
          %v1230 = vmax.f32 %v1187, 0.0
          %v1231 = vmax.f32 %v1189, 0.0
          %v1232 = vmax.f32 %v1192, 0.0
          %v1233 = vmax.f32 %v1194, 0.0
          %v1234 = vmax.f32 %v1197, 0.0
          %v1235 = vmax.f32 %v1199, 0.0
          %v1236 = vmax.f32 %v1202, 0.0
          %v1237 = vmax.f32 %v1204, 0.0
          %v1238 = vpack.c.bf16 %v1207, %v1206
          %v1239 = vpack.c.bf16 %v1209, %v1208
          %v1240 = vpack.c.bf16 %v1211, %v1210
          %v1241 = vpack.c.bf16 %v1213, %v1212
          %v1242 = vpack.c.bf16 %v1215, %v1214
          %v1243 = vpack.c.bf16 %v1217, %v1216
          %v1244 = vpack.c.bf16 %v1219, %v1218
          %v1245 = vpack.c.bf16 %v1221, %v1220
          %v1246 = vpack.c.bf16 %v1223, %v1222
          %v1247 = vpack.c.bf16 %v1225, %v1224
          %v1248 = vpack.c.bf16 %v1227, %v1226
          %v1249 = vpack.c.bf16 %v1229, %v1228
          %v1250 = vpack.c.bf16 %v1231, %v1230
          %v1251 = vpack.c.bf16 %v1233, %v1232
          %v1252 = vpack.c.bf16 %v1235, %v1234
          %v1253 = vpack.c.bf16 %v1237, %v1236
          %s1254 = scalar_lea.vmem %s3, 96
          %v1255 = vld [vmem:[%s1254] sm:$0xf]
          %v1256 = vld [vmem:[%s1254 + $0x4] sm:$0xf]
          %v1257 = vld [vmem:[%s1254 + $0x8] sm:$0xf]
          %v1258 = vld [vmem:[%s1254 + $0xc] sm:$0xf]
          %v1259 = vld [vmem:[%s1254 + $0x10] sm:$0xf]
          %v1260 = vld [vmem:[%s1254 + $0x14] sm:$0xf]
          %v1261 = vld [vmem:[%s1254 + $0x18] sm:$0xf]
          %v1262 = vld [vmem:[%s1254 + $0x1c] sm:$0xf]
          %s1263 = scalar_lea.vmem %s4, 3
          %v1264 = vld [vmem:[%s1263] sm:$0x1]
          %v1266 = vperm.slane %v1264, 0
          %v1276 = vunpack.c.l.b16 %v1255
          %v1277 = vunpack.c.l.b16 %v1256
          %v1278 = vunpack.c.l.b16 %v1257
          %v1279 = vunpack.c.l.b16 %v1258
          %v1280 = vunpack.c.l.b16 %v1259
          %v1281 = vunpack.c.l.b16 %v1260
          %v1282 = vunpack.c.l.b16 %v1261
          %v1283 = vunpack.c.l.b16 %v1262
          %v1284 = vpack.c.b16 %v1277, %v1276
          %v1285 = vpack.c.b16 %v1279, %v1278
          %v1286 = vpack.c.b16 %v1281, %v1280
          %v1287 = vpack.c.b16 %v1283, %v1282
          %v1293 = vsel %vm622, %v1238, 0
          %v1296 = vsel %vm622, %v1239, 0
          %v1299 = vsel %vm622, %v1240, 0
          %v1302 = vsel %vm622, %v1241, 0
          %v1305 = vsel %vm622, %v1242, 0
          %v1308 = vsel %vm622, %v1243, 0
          %v1311 = vsel %vm622, %v1244, 0
          %v1314 = vsel %vm622, %v1245, 0
          %v1317 = vsel %vm622, %v1246, 0
          %v1320 = vsel %vm622, %v1247, 0
          %v1323 = vsel %vm622, %v1248, 0
          %v1326 = vsel %vm622, %v1249, 0
          %v1329 = vsel %vm622, %v1250, 0
          %v1332 = vsel %vm622, %v1251, 0
          %v1335 = vsel %vm622, %v1252, 0
          %v1338 = vsel %vm622, %v1253, 0
          %1340 = vmatpush.bf16.msra.mxu0 0
          %1341 = vmatpush.bf16.msra.mxu0 0
          %1342 = vmatpush.bf16.msra.mxu0 0
          %1343 = vmatpush.bf16.msra.mxu0 0
          %1344 = vmatpush.bf16.msra.mxu0 %v1287
          %1345 = vmatpush.bf16.msra.mxu0 %v1286
          %1346 = vmatpush.bf16.msra.mxu0 %v1285
          %1347 = vmatpush.bf16.msra.mxu0 %v1284
          %1348 = vmatmul.bf16.gmra.mxu0 %v1293
          %v1349 = vpop.f32.mrf.mxu0
          %v1350 = vadd.f32 %v1266, %v1349
          %v1351 = vpop.f32.mrf.mxu0
          %v1352 = vadd.f32 %v1266, %v1351
          %1353 = vmatmul.bf16.gmra.mxu0 %v1296
          %v1354 = vpop.f32.mrf.mxu0
          %v1355 = vadd.f32 %v1266, %v1354
          %v1356 = vpop.f32.mrf.mxu0
          %v1357 = vadd.f32 %v1266, %v1356
          %1358 = vmatmul.bf16.gmra.mxu0 %v1299
          %v1359 = vpop.f32.mrf.mxu0
          %v1360 = vadd.f32 %v1266, %v1359
          %v1361 = vpop.f32.mrf.mxu0
          %v1362 = vadd.f32 %v1266, %v1361
          %1363 = vmatmul.bf16.gmra.mxu0 %v1302
          %v1364 = vpop.f32.mrf.mxu0
          %v1365 = vadd.f32 %v1266, %v1364
          %v1366 = vpop.f32.mrf.mxu0
          %v1367 = vadd.f32 %v1266, %v1366
          %1368 = vmatmul.bf16.gmra.mxu0 %v1305
          %v1369 = vpop.f32.mrf.mxu0
          %v1370 = vadd.f32 %v1266, %v1369
          %v1371 = vpop.f32.mrf.mxu0
          %v1372 = vadd.f32 %v1266, %v1371
          %1373 = vmatmul.bf16.gmra.mxu0 %v1308
          %v1374 = vpop.f32.mrf.mxu0
          %v1375 = vadd.f32 %v1266, %v1374
          %v1376 = vpop.f32.mrf.mxu0
          %v1377 = vadd.f32 %v1266, %v1376
          %1378 = vmatmul.bf16.gmra.mxu0 %v1311
          %v1379 = vpop.f32.mrf.mxu0
          %v1380 = vadd.f32 %v1266, %v1379
          %v1381 = vpop.f32.mrf.mxu0
          %v1382 = vadd.f32 %v1266, %v1381
          %1383 = vmatmul.bf16.gmra.mxu0 %v1314
          %v1384 = vpop.f32.mrf.mxu0
          %v1385 = vadd.f32 %v1266, %v1384
          %v1386 = vpop.f32.mrf.mxu0
          %v1387 = vadd.f32 %v1266, %v1386
          %1388 = vmatmul.bf16.gmra.mxu0 %v1317
          %v1389 = vpop.f32.mrf.mxu0
          %v1390 = vadd.f32 %v1266, %v1389
          %v1391 = vpop.f32.mrf.mxu0
          %v1392 = vadd.f32 %v1266, %v1391
          %1393 = vmatmul.bf16.gmra.mxu0 %v1320
          %v1394 = vpop.f32.mrf.mxu0
          %v1395 = vadd.f32 %v1266, %v1394
          %v1396 = vpop.f32.mrf.mxu0
          %v1397 = vadd.f32 %v1266, %v1396
          %1398 = vmatmul.bf16.gmra.mxu0 %v1323
          %v1399 = vpop.f32.mrf.mxu0
          %v1400 = vadd.f32 %v1266, %v1399
          %v1401 = vpop.f32.mrf.mxu0
          %v1402 = vadd.f32 %v1266, %v1401
          %1403 = vmatmul.bf16.gmra.mxu0 %v1326
          %v1404 = vpop.f32.mrf.mxu0
          %v1405 = vadd.f32 %v1266, %v1404
          %v1406 = vpop.f32.mrf.mxu0
          %v1407 = vadd.f32 %v1266, %v1406
          %1408 = vmatmul.bf16.gmra.mxu0 %v1329
          %v1409 = vpop.f32.mrf.mxu0
          %v1410 = vadd.f32 %v1266, %v1409
          %v1411 = vpop.f32.mrf.mxu0
          %v1412 = vadd.f32 %v1266, %v1411
          %1413 = vmatmul.bf16.gmra.mxu0 %v1332
          %v1414 = vpop.f32.mrf.mxu0
          %v1415 = vadd.f32 %v1266, %v1414
          %v1416 = vpop.f32.mrf.mxu0
          %v1417 = vadd.f32 %v1266, %v1416
          %1418 = vmatmul.bf16.gmra.mxu0 %v1335
          %v1419 = vpop.f32.mrf.mxu0
          %v1420 = vadd.f32 %v1266, %v1419
          %v1421 = vpop.f32.mrf.mxu0
          %v1422 = vadd.f32 %v1266, %v1421
          %1423 = vmatmul.bf16.gmra.mxu0 %v1338
          %v1424 = vpop.f32.mrf.mxu0
          %v1425 = vadd.f32 %v1266, %v1424
          %v1426 = vpop.f32.mrf.mxu0
          %v1427 = vadd.f32 %v1266, %v1426
          %1428 = vdwg.mxu0
          %v1429 = vmax.f32 %v1350, 0.0
          %v1430 = vmax.f32 %v1352, 0.0
          %v1431 = vmax.f32 %v1355, 0.0
          %v1432 = vmax.f32 %v1357, 0.0
          %v1433 = vmax.f32 %v1360, 0.0
          %v1434 = vmax.f32 %v1362, 0.0
          %v1435 = vmax.f32 %v1365, 0.0
          %v1436 = vmax.f32 %v1367, 0.0
          %v1437 = vmax.f32 %v1370, 0.0
          %v1438 = vmax.f32 %v1372, 0.0
          %v1439 = vmax.f32 %v1375, 0.0
          %v1440 = vmax.f32 %v1377, 0.0
          %v1441 = vmax.f32 %v1380, 0.0
          %v1442 = vmax.f32 %v1382, 0.0
          %v1443 = vmax.f32 %v1385, 0.0
          %v1444 = vmax.f32 %v1387, 0.0
          %v1445 = vmax.f32 %v1390, 0.0
          %v1446 = vmax.f32 %v1392, 0.0
          %v1447 = vmax.f32 %v1395, 0.0
          %v1448 = vmax.f32 %v1397, 0.0
          %v1449 = vmax.f32 %v1400, 0.0
          %v1450 = vmax.f32 %v1402, 0.0
          %v1451 = vmax.f32 %v1405, 0.0
          %v1452 = vmax.f32 %v1407, 0.0
          %v1453 = vmax.f32 %v1410, 0.0
          %v1454 = vmax.f32 %v1412, 0.0
          %v1455 = vmax.f32 %v1415, 0.0
          %v1456 = vmax.f32 %v1417, 0.0
          %v1457 = vmax.f32 %v1420, 0.0
          %v1458 = vmax.f32 %v1422, 0.0
          %v1459 = vmax.f32 %v1425, 0.0
          %v1460 = vmax.f32 %v1427, 0.0
          %v1461 = vpack.c.bf16 %v1430, %v1429
          %v1462 = vpack.c.bf16 %v1432, %v1431
          %v1463 = vpack.c.bf16 %v1434, %v1433
          %v1464 = vpack.c.bf16 %v1436, %v1435
          %v1465 = vpack.c.bf16 %v1438, %v1437
          %v1466 = vpack.c.bf16 %v1440, %v1439
          %v1467 = vpack.c.bf16 %v1442, %v1441
          %v1468 = vpack.c.bf16 %v1444, %v1443
          %v1469 = vpack.c.bf16 %v1446, %v1445
          %v1470 = vpack.c.bf16 %v1448, %v1447
          %v1471 = vpack.c.bf16 %v1450, %v1449
          %v1472 = vpack.c.bf16 %v1452, %v1451
          %v1473 = vpack.c.bf16 %v1454, %v1453
          %v1474 = vpack.c.bf16 %v1456, %v1455
          %v1475 = vpack.c.bf16 %v1458, %v1457
          %v1476 = vpack.c.bf16 %v1460, %v1459
          %s1477 = scalar_lea.vmem %s3, 128
          %v1478 = vld [vmem:[%s1477] sm:$0xf]
          %v1479 = vld [vmem:[%s1477 + $0x4] sm:$0xf]
          %v1480 = vld [vmem:[%s1477 + $0x8] sm:$0xf]
          %v1481 = vld [vmem:[%s1477 + $0xc] sm:$0xf]
          %v1482 = vld [vmem:[%s1477 + $0x10] sm:$0xf]
          %v1483 = vld [vmem:[%s1477 + $0x14] sm:$0xf]
          %v1484 = vld [vmem:[%s1477 + $0x18] sm:$0xf]
          %v1485 = vld [vmem:[%s1477 + $0x1c] sm:$0xf]
          %s1486 = scalar_lea.vmem %s4, 4
          %v1487 = vld [vmem:[%s1486] sm:$0x1]
          %v1489 = vperm.slane %v1487, 0
          %v1499 = vunpack.c.l.b16 %v1478
          %v1500 = vunpack.c.l.b16 %v1479
          %v1501 = vunpack.c.l.b16 %v1480
          %v1502 = vunpack.c.l.b16 %v1481
          %v1503 = vunpack.c.l.b16 %v1482
          %v1504 = vunpack.c.l.b16 %v1483
          %v1505 = vunpack.c.l.b16 %v1484
          %v1506 = vunpack.c.l.b16 %v1485
          %v1507 = vpack.c.b16 %v1500, %v1499
          %v1508 = vpack.c.b16 %v1502, %v1501
          %v1509 = vpack.c.b16 %v1504, %v1503
          %v1510 = vpack.c.b16 %v1506, %v1505
          %v1516 = vsel %vm622, %v1461, 0
          %v1519 = vsel %vm622, %v1462, 0
          %v1522 = vsel %vm622, %v1463, 0
          %v1525 = vsel %vm622, %v1464, 0
          %v1528 = vsel %vm622, %v1465, 0
          %v1531 = vsel %vm622, %v1466, 0
          %v1534 = vsel %vm622, %v1467, 0
          %v1537 = vsel %vm622, %v1468, 0
          %v1540 = vsel %vm622, %v1469, 0
          %v1543 = vsel %vm622, %v1470, 0
          %v1546 = vsel %vm622, %v1471, 0
          %v1549 = vsel %vm622, %v1472, 0
          %v1552 = vsel %vm622, %v1473, 0
          %v1555 = vsel %vm622, %v1474, 0
          %v1558 = vsel %vm622, %v1475, 0
          %v1561 = vsel %vm622, %v1476, 0
          %1563 = vmatpush.bf16.msra.mxu0 0
          %1564 = vmatpush.bf16.msra.mxu0 0
          %1565 = vmatpush.bf16.msra.mxu0 0
          %1566 = vmatpush.bf16.msra.mxu0 0
          %1567 = vmatpush.bf16.msra.mxu0 %v1510
          %1568 = vmatpush.bf16.msra.mxu0 %v1509
          %1569 = vmatpush.bf16.msra.mxu0 %v1508
          %1570 = vmatpush.bf16.msra.mxu0 %v1507
          %1571 = vmatmul.bf16.gmra.mxu0 %v1516
          %v1572 = vpop.f32.mrf.mxu0
          %v1573 = vadd.f32 %v1489, %v1572
          %v1574 = vpop.f32.mrf.mxu0
          %v1575 = vadd.f32 %v1489, %v1574
          %1576 = vmatmul.bf16.gmra.mxu0 %v1519
          %v1577 = vpop.f32.mrf.mxu0
          %v1578 = vadd.f32 %v1489, %v1577
          %v1579 = vpop.f32.mrf.mxu0
          %v1580 = vadd.f32 %v1489, %v1579
          %1581 = vmatmul.bf16.gmra.mxu0 %v1522
          %v1582 = vpop.f32.mrf.mxu0
          %v1583 = vadd.f32 %v1489, %v1582
          %v1584 = vpop.f32.mrf.mxu0
          %v1585 = vadd.f32 %v1489, %v1584
          %1586 = vmatmul.bf16.gmra.mxu0 %v1525
          %v1587 = vpop.f32.mrf.mxu0
          %v1588 = vadd.f32 %v1489, %v1587
          %v1589 = vpop.f32.mrf.mxu0
          %v1590 = vadd.f32 %v1489, %v1589
          %1591 = vmatmul.bf16.gmra.mxu0 %v1528
          %v1592 = vpop.f32.mrf.mxu0
          %v1593 = vadd.f32 %v1489, %v1592
          %v1594 = vpop.f32.mrf.mxu0
          %v1595 = vadd.f32 %v1489, %v1594
          %1596 = vmatmul.bf16.gmra.mxu0 %v1531
          %v1597 = vpop.f32.mrf.mxu0
          %v1598 = vadd.f32 %v1489, %v1597
          %v1599 = vpop.f32.mrf.mxu0
          %v1600 = vadd.f32 %v1489, %v1599
          %1601 = vmatmul.bf16.gmra.mxu0 %v1534
          %v1602 = vpop.f32.mrf.mxu0
          %v1603 = vadd.f32 %v1489, %v1602
          %v1604 = vpop.f32.mrf.mxu0
          %v1605 = vadd.f32 %v1489, %v1604
          %1606 = vmatmul.bf16.gmra.mxu0 %v1537
          %v1607 = vpop.f32.mrf.mxu0
          %v1608 = vadd.f32 %v1489, %v1607
          %v1609 = vpop.f32.mrf.mxu0
          %v1610 = vadd.f32 %v1489, %v1609
          %1611 = vmatmul.bf16.gmra.mxu0 %v1540
          %v1612 = vpop.f32.mrf.mxu0
          %v1613 = vadd.f32 %v1489, %v1612
          %v1614 = vpop.f32.mrf.mxu0
          %v1615 = vadd.f32 %v1489, %v1614
          %1616 = vmatmul.bf16.gmra.mxu0 %v1543
          %v1617 = vpop.f32.mrf.mxu0
          %v1618 = vadd.f32 %v1489, %v1617
          %v1619 = vpop.f32.mrf.mxu0
          %v1620 = vadd.f32 %v1489, %v1619
          %1621 = vmatmul.bf16.gmra.mxu0 %v1546
          %v1622 = vpop.f32.mrf.mxu0
          %v1623 = vadd.f32 %v1489, %v1622
          %v1624 = vpop.f32.mrf.mxu0
          %v1625 = vadd.f32 %v1489, %v1624
          %1626 = vmatmul.bf16.gmra.mxu0 %v1549
          %v1627 = vpop.f32.mrf.mxu0
          %v1628 = vadd.f32 %v1489, %v1627
          %v1629 = vpop.f32.mrf.mxu0
          %v1630 = vadd.f32 %v1489, %v1629
          %1631 = vmatmul.bf16.gmra.mxu0 %v1552
          %v1632 = vpop.f32.mrf.mxu0
          %v1633 = vadd.f32 %v1489, %v1632
          %v1634 = vpop.f32.mrf.mxu0
          %v1635 = vadd.f32 %v1489, %v1634
          %1636 = vmatmul.bf16.gmra.mxu0 %v1555
          %v1637 = vpop.f32.mrf.mxu0
          %v1638 = vadd.f32 %v1489, %v1637
          %v1639 = vpop.f32.mrf.mxu0
          %v1640 = vadd.f32 %v1489, %v1639
          %1641 = vmatmul.bf16.gmra.mxu0 %v1558
          %v1642 = vpop.f32.mrf.mxu0
          %v1643 = vadd.f32 %v1489, %v1642
          %v1644 = vpop.f32.mrf.mxu0
          %v1645 = vadd.f32 %v1489, %v1644
          %1646 = vmatmul.bf16.gmra.mxu0 %v1561
          %v1647 = vpop.f32.mrf.mxu0
          %v1648 = vadd.f32 %v1489, %v1647
          %v1649 = vpop.f32.mrf.mxu0
          %v1650 = vadd.f32 %v1489, %v1649
          %1651 = vdwg.mxu0
          %v1652 = vmax.f32 %v1573, 0.0
          %v1653 = vmax.f32 %v1575, 0.0
          %v1654 = vmax.f32 %v1578, 0.0
          %v1655 = vmax.f32 %v1580, 0.0
          %v1656 = vmax.f32 %v1583, 0.0
          %v1657 = vmax.f32 %v1585, 0.0
          %v1658 = vmax.f32 %v1588, 0.0
          %v1659 = vmax.f32 %v1590, 0.0
          %v1660 = vmax.f32 %v1593, 0.0
          %v1661 = vmax.f32 %v1595, 0.0
          %v1662 = vmax.f32 %v1598, 0.0
          %v1663 = vmax.f32 %v1600, 0.0
          %v1664 = vmax.f32 %v1603, 0.0
          %v1665 = vmax.f32 %v1605, 0.0
          %v1666 = vmax.f32 %v1608, 0.0
          %v1667 = vmax.f32 %v1610, 0.0
          %v1668 = vmax.f32 %v1613, 0.0
          %v1669 = vmax.f32 %v1615, 0.0
          %v1670 = vmax.f32 %v1618, 0.0
          %v1671 = vmax.f32 %v1620, 0.0
          %v1672 = vmax.f32 %v1623, 0.0
          %v1673 = vmax.f32 %v1625, 0.0
          %v1674 = vmax.f32 %v1628, 0.0
          %v1675 = vmax.f32 %v1630, 0.0
          %v1676 = vmax.f32 %v1633, 0.0
          %v1677 = vmax.f32 %v1635, 0.0
          %v1678 = vmax.f32 %v1638, 0.0
          %v1679 = vmax.f32 %v1640, 0.0
          %v1680 = vmax.f32 %v1643, 0.0
          %v1681 = vmax.f32 %v1645, 0.0
          %v1682 = vmax.f32 %v1648, 0.0
          %v1683 = vmax.f32 %v1650, 0.0
          %v1684 = vpack.c.bf16 %v1653, %v1652
          %v1685 = vpack.c.bf16 %v1655, %v1654
          %v1686 = vpack.c.bf16 %v1657, %v1656
          %v1687 = vpack.c.bf16 %v1659, %v1658
          %v1688 = vpack.c.bf16 %v1661, %v1660
          %v1689 = vpack.c.bf16 %v1663, %v1662
          %v1690 = vpack.c.bf16 %v1665, %v1664
          %v1691 = vpack.c.bf16 %v1667, %v1666
          %v1692 = vpack.c.bf16 %v1669, %v1668
          %v1693 = vpack.c.bf16 %v1671, %v1670
          %v1694 = vpack.c.bf16 %v1673, %v1672
          %v1695 = vpack.c.bf16 %v1675, %v1674
          %v1696 = vpack.c.bf16 %v1677, %v1676
          %v1697 = vpack.c.bf16 %v1679, %v1678
          %v1698 = vpack.c.bf16 %v1681, %v1680
          %v1699 = vpack.c.bf16 %v1683, %v1682
          %s1700 = scalar_lea.vmem %s3, 160
          %v1701 = vld [vmem:[%s1700] sm:$0xf]
          %v1702 = vld [vmem:[%s1700 + $0x4] sm:$0xf]
          %v1703 = vld [vmem:[%s1700 + $0x8] sm:$0xf]
          %v1704 = vld [vmem:[%s1700 + $0xc] sm:$0xf]
          %v1705 = vld [vmem:[%s1700 + $0x10] sm:$0xf]
          %v1706 = vld [vmem:[%s1700 + $0x14] sm:$0xf]
          %v1707 = vld [vmem:[%s1700 + $0x18] sm:$0xf]
          %v1708 = vld [vmem:[%s1700 + $0x1c] sm:$0xf]
          %s1709 = scalar_lea.vmem %s4, 5
          %v1710 = vld [vmem:[%s1709] sm:$0x1]
          %v1712 = vperm.slane %v1710, 0
          %v1722 = vunpack.c.l.b16 %v1701
          %v1723 = vunpack.c.l.b16 %v1702
          %v1724 = vunpack.c.l.b16 %v1703
          %v1725 = vunpack.c.l.b16 %v1704
          %v1726 = vunpack.c.l.b16 %v1705
          %v1727 = vunpack.c.l.b16 %v1706
          %v1728 = vunpack.c.l.b16 %v1707
          %v1729 = vunpack.c.l.b16 %v1708
          %v1730 = vpack.c.b16 %v1723, %v1722
          %v1731 = vpack.c.b16 %v1725, %v1724
          %v1732 = vpack.c.b16 %v1727, %v1726
          %v1733 = vpack.c.b16 %v1729, %v1728
          %v1739 = vsel %vm622, %v1684, 0
          %v1742 = vsel %vm622, %v1685, 0
          %v1745 = vsel %vm622, %v1686, 0
          %v1748 = vsel %vm622, %v1687, 0
          %v1751 = vsel %vm622, %v1688, 0
          %v1754 = vsel %vm622, %v1689, 0
          %v1757 = vsel %vm622, %v1690, 0
          %v1760 = vsel %vm622, %v1691, 0
          %v1763 = vsel %vm622, %v1692, 0
          %v1766 = vsel %vm622, %v1693, 0
          %v1769 = vsel %vm622, %v1694, 0
          %v1772 = vsel %vm622, %v1695, 0
          %v1775 = vsel %vm622, %v1696, 0
          %v1778 = vsel %vm622, %v1697, 0
          %v1781 = vsel %vm622, %v1698, 0
          %v1784 = vsel %vm622, %v1699, 0
          %1786 = vmatpush.bf16.msra.mxu0 0
          %1787 = vmatpush.bf16.msra.mxu0 0
          %1788 = vmatpush.bf16.msra.mxu0 0
          %1789 = vmatpush.bf16.msra.mxu0 0
          %1790 = vmatpush.bf16.msra.mxu0 %v1733
          %1791 = vmatpush.bf16.msra.mxu0 %v1732
          %1792 = vmatpush.bf16.msra.mxu0 %v1731
          %1793 = vmatpush.bf16.msra.mxu0 %v1730
          %1794 = vmatmul.bf16.gmra.mxu0 %v1739
          %v1795 = vpop.f32.mrf.mxu0
          %v1796 = vadd.f32 %v1712, %v1795
          %v1797 = vpop.f32.mrf.mxu0
          %v1798 = vadd.f32 %v1712, %v1797
          %1799 = vmatmul.bf16.gmra.mxu0 %v1742
          %v1800 = vpop.f32.mrf.mxu0
          %v1801 = vadd.f32 %v1712, %v1800
          %v1802 = vpop.f32.mrf.mxu0
          %v1803 = vadd.f32 %v1712, %v1802
          %1804 = vmatmul.bf16.gmra.mxu0 %v1745
          %v1805 = vpop.f32.mrf.mxu0
          %v1806 = vadd.f32 %v1712, %v1805
          %v1807 = vpop.f32.mrf.mxu0
          %v1808 = vadd.f32 %v1712, %v1807
          %1809 = vmatmul.bf16.gmra.mxu0 %v1748
          %v1810 = vpop.f32.mrf.mxu0
          %v1811 = vadd.f32 %v1712, %v1810
          %v1812 = vpop.f32.mrf.mxu0
          %v1813 = vadd.f32 %v1712, %v1812
          %1814 = vmatmul.bf16.gmra.mxu0 %v1751
          %v1815 = vpop.f32.mrf.mxu0
          %v1816 = vadd.f32 %v1712, %v1815
          %v1817 = vpop.f32.mrf.mxu0
          %v1818 = vadd.f32 %v1712, %v1817
          %1819 = vmatmul.bf16.gmra.mxu0 %v1754
          %v1820 = vpop.f32.mrf.mxu0
          %v1821 = vadd.f32 %v1712, %v1820
          %v1822 = vpop.f32.mrf.mxu0
          %v1823 = vadd.f32 %v1712, %v1822
          %1824 = vmatmul.bf16.gmra.mxu0 %v1757
          %v1825 = vpop.f32.mrf.mxu0
          %v1826 = vadd.f32 %v1712, %v1825
          %v1827 = vpop.f32.mrf.mxu0
          %v1828 = vadd.f32 %v1712, %v1827
          %1829 = vmatmul.bf16.gmra.mxu0 %v1760
          %v1830 = vpop.f32.mrf.mxu0
          %v1831 = vadd.f32 %v1712, %v1830
          %v1832 = vpop.f32.mrf.mxu0
          %v1833 = vadd.f32 %v1712, %v1832
          %1834 = vmatmul.bf16.gmra.mxu0 %v1763
          %v1835 = vpop.f32.mrf.mxu0
          %v1836 = vadd.f32 %v1712, %v1835
          %v1837 = vpop.f32.mrf.mxu0
          %v1838 = vadd.f32 %v1712, %v1837
          %1839 = vmatmul.bf16.gmra.mxu0 %v1766
          %v1840 = vpop.f32.mrf.mxu0
          %v1841 = vadd.f32 %v1712, %v1840
          %v1842 = vpop.f32.mrf.mxu0
          %v1843 = vadd.f32 %v1712, %v1842
          %1844 = vmatmul.bf16.gmra.mxu0 %v1769
          %v1845 = vpop.f32.mrf.mxu0
          %v1846 = vadd.f32 %v1712, %v1845
          %v1847 = vpop.f32.mrf.mxu0
          %v1848 = vadd.f32 %v1712, %v1847
          %1849 = vmatmul.bf16.gmra.mxu0 %v1772
          %v1850 = vpop.f32.mrf.mxu0
          %v1851 = vadd.f32 %v1712, %v1850
          %v1852 = vpop.f32.mrf.mxu0
          %v1853 = vadd.f32 %v1712, %v1852
          %1854 = vmatmul.bf16.gmra.mxu0 %v1775
          %v1855 = vpop.f32.mrf.mxu0
          %v1856 = vadd.f32 %v1712, %v1855
          %v1857 = vpop.f32.mrf.mxu0
          %v1858 = vadd.f32 %v1712, %v1857
          %1859 = vmatmul.bf16.gmra.mxu0 %v1778
          %v1860 = vpop.f32.mrf.mxu0
          %v1861 = vadd.f32 %v1712, %v1860
          %v1862 = vpop.f32.mrf.mxu0
          %v1863 = vadd.f32 %v1712, %v1862
          %1864 = vmatmul.bf16.gmra.mxu0 %v1781
          %v1865 = vpop.f32.mrf.mxu0
          %v1866 = vadd.f32 %v1712, %v1865
          %v1867 = vpop.f32.mrf.mxu0
          %v1868 = vadd.f32 %v1712, %v1867
          %1869 = vmatmul.bf16.gmra.mxu0 %v1784
          %v1870 = vpop.f32.mrf.mxu0
          %v1871 = vadd.f32 %v1712, %v1870
          %v1872 = vpop.f32.mrf.mxu0
          %v1873 = vadd.f32 %v1712, %v1872
          %1874 = vdwg.mxu0
          %v1875 = vmax.f32 %v1796, 0.0
          %v1876 = vmax.f32 %v1798, 0.0
          %v1877 = vmax.f32 %v1801, 0.0
          %v1878 = vmax.f32 %v1803, 0.0
          %v1879 = vmax.f32 %v1806, 0.0
          %v1880 = vmax.f32 %v1808, 0.0
          %v1881 = vmax.f32 %v1811, 0.0
          %v1882 = vmax.f32 %v1813, 0.0
          %v1883 = vmax.f32 %v1816, 0.0
          %v1884 = vmax.f32 %v1818, 0.0
          %v1885 = vmax.f32 %v1821, 0.0
          %v1886 = vmax.f32 %v1823, 0.0
          %v1887 = vmax.f32 %v1826, 0.0
          %v1888 = vmax.f32 %v1828, 0.0
          %v1889 = vmax.f32 %v1831, 0.0
          %v1890 = vmax.f32 %v1833, 0.0
          %v1891 = vmax.f32 %v1836, 0.0
          %v1892 = vmax.f32 %v1838, 0.0
          %v1893 = vmax.f32 %v1841, 0.0
          %v1894 = vmax.f32 %v1843, 0.0
          %v1895 = vmax.f32 %v1846, 0.0
          %v1896 = vmax.f32 %v1848, 0.0
          %v1897 = vmax.f32 %v1851, 0.0
          %v1898 = vmax.f32 %v1853, 0.0
          %v1899 = vmax.f32 %v1856, 0.0
          %v1900 = vmax.f32 %v1858, 0.0
          %v1901 = vmax.f32 %v1861, 0.0
          %v1902 = vmax.f32 %v1863, 0.0
          %v1903 = vmax.f32 %v1866, 0.0
          %v1904 = vmax.f32 %v1868, 0.0
          %v1905 = vmax.f32 %v1871, 0.0
          %v1906 = vmax.f32 %v1873, 0.0
          %v1907 = vpack.c.bf16 %v1876, %v1875
          %v1908 = vpack.c.bf16 %v1878, %v1877
          %v1909 = vpack.c.bf16 %v1880, %v1879
          %v1910 = vpack.c.bf16 %v1882, %v1881
          %v1911 = vpack.c.bf16 %v1884, %v1883
          %v1912 = vpack.c.bf16 %v1886, %v1885
          %v1913 = vpack.c.bf16 %v1888, %v1887
          %v1914 = vpack.c.bf16 %v1890, %v1889
          %v1915 = vpack.c.bf16 %v1892, %v1891
          %v1916 = vpack.c.bf16 %v1894, %v1893
          %v1917 = vpack.c.bf16 %v1896, %v1895
          %v1918 = vpack.c.bf16 %v1898, %v1897
          %v1919 = vpack.c.bf16 %v1900, %v1899
          %v1920 = vpack.c.bf16 %v1902, %v1901
          %v1921 = vpack.c.bf16 %v1904, %v1903
          %v1922 = vpack.c.bf16 %v1906, %v1905
          %s1923 = scalar_lea.vmem %s3, 192
          %v1924 = vld [vmem:[%s1923] sm:$0xf]
          %v1925 = vld [vmem:[%s1923 + $0x4] sm:$0xf]
          %v1926 = vld [vmem:[%s1923 + $0x8] sm:$0xf]
          %v1927 = vld [vmem:[%s1923 + $0xc] sm:$0xf]
          %v1928 = vld [vmem:[%s1923 + $0x10] sm:$0xf]
          %v1929 = vld [vmem:[%s1923 + $0x14] sm:$0xf]
          %v1930 = vld [vmem:[%s1923 + $0x18] sm:$0xf]
          %v1931 = vld [vmem:[%s1923 + $0x1c] sm:$0xf]
          %s1932 = scalar_lea.vmem %s4, 6
          %v1933 = vld [vmem:[%s1932] sm:$0x1]
          %v1935 = vperm.slane %v1933, 0
          %v1945 = vunpack.c.l.b16 %v1924
          %v1946 = vunpack.c.l.b16 %v1925
          %v1947 = vunpack.c.l.b16 %v1926
          %v1948 = vunpack.c.l.b16 %v1927
          %v1949 = vunpack.c.l.b16 %v1928
          %v1950 = vunpack.c.l.b16 %v1929
          %v1951 = vunpack.c.l.b16 %v1930
          %v1952 = vunpack.c.l.b16 %v1931
          %v1953 = vpack.c.b16 %v1946, %v1945
          %v1954 = vpack.c.b16 %v1948, %v1947
          %v1955 = vpack.c.b16 %v1950, %v1949
          %v1956 = vpack.c.b16 %v1952, %v1951
          %v1962 = vsel %vm622, %v1907, 0
          %v1965 = vsel %vm622, %v1908, 0
          %v1968 = vsel %vm622, %v1909, 0
          %v1971 = vsel %vm622, %v1910, 0
          %v1974 = vsel %vm622, %v1911, 0
          %v1977 = vsel %vm622, %v1912, 0
          %v1980 = vsel %vm622, %v1913, 0
          %v1983 = vsel %vm622, %v1914, 0
          %v1986 = vsel %vm622, %v1915, 0
          %v1989 = vsel %vm622, %v1916, 0
          %v1992 = vsel %vm622, %v1917, 0
          %v1995 = vsel %vm622, %v1918, 0
          %v1998 = vsel %vm622, %v1919, 0
          %v2001 = vsel %vm622, %v1920, 0
          %v2004 = vsel %vm622, %v1921, 0
          %v2007 = vsel %vm622, %v1922, 0
          %2009 = vmatpush.bf16.msra.mxu0 0
          %2010 = vmatpush.bf16.msra.mxu0 0
          %2011 = vmatpush.bf16.msra.mxu0 0
          %2012 = vmatpush.bf16.msra.mxu0 0
          %2013 = vmatpush.bf16.msra.mxu0 %v1956
          %2014 = vmatpush.bf16.msra.mxu0 %v1955
          %2015 = vmatpush.bf16.msra.mxu0 %v1954
          %2016 = vmatpush.bf16.msra.mxu0 %v1953
          %2017 = vmatmul.bf16.gmra.mxu0 %v1962
          %v2018 = vpop.f32.mrf.mxu0
          %v2019 = vadd.f32 %v1935, %v2018
          %v2020 = vpop.f32.mrf.mxu0
          %v2021 = vadd.f32 %v1935, %v2020
          %2022 = vmatmul.bf16.gmra.mxu0 %v1965
          %v2023 = vpop.f32.mrf.mxu0
          %v2024 = vadd.f32 %v1935, %v2023
          %v2025 = vpop.f32.mrf.mxu0
          %v2026 = vadd.f32 %v1935, %v2025
          %2027 = vmatmul.bf16.gmra.mxu0 %v1968
          %v2028 = vpop.f32.mrf.mxu0
          %v2029 = vadd.f32 %v1935, %v2028
          %v2030 = vpop.f32.mrf.mxu0
          %v2031 = vadd.f32 %v1935, %v2030
          %2032 = vmatmul.bf16.gmra.mxu0 %v1971
          %v2033 = vpop.f32.mrf.mxu0
          %v2034 = vadd.f32 %v1935, %v2033
          %v2035 = vpop.f32.mrf.mxu0
          %v2036 = vadd.f32 %v1935, %v2035
          %2037 = vmatmul.bf16.gmra.mxu0 %v1974
          %v2038 = vpop.f32.mrf.mxu0
          %v2039 = vadd.f32 %v1935, %v2038
          %v2040 = vpop.f32.mrf.mxu0
          %v2041 = vadd.f32 %v1935, %v2040
          %2042 = vmatmul.bf16.gmra.mxu0 %v1977
          %v2043 = vpop.f32.mrf.mxu0
          %v2044 = vadd.f32 %v1935, %v2043
          %v2045 = vpop.f32.mrf.mxu0
          %v2046 = vadd.f32 %v1935, %v2045
          %2047 = vmatmul.bf16.gmra.mxu0 %v1980
          %v2048 = vpop.f32.mrf.mxu0
          %v2049 = vadd.f32 %v1935, %v2048
          %v2050 = vpop.f32.mrf.mxu0
          %v2051 = vadd.f32 %v1935, %v2050
          %2052 = vmatmul.bf16.gmra.mxu0 %v1983
          %v2053 = vpop.f32.mrf.mxu0
          %v2054 = vadd.f32 %v1935, %v2053
          %v2055 = vpop.f32.mrf.mxu0
          %v2056 = vadd.f32 %v1935, %v2055
          %2057 = vmatmul.bf16.gmra.mxu0 %v1986
          %v2058 = vpop.f32.mrf.mxu0
          %v2059 = vadd.f32 %v1935, %v2058
          %v2060 = vpop.f32.mrf.mxu0
          %v2061 = vadd.f32 %v1935, %v2060
          %2062 = vmatmul.bf16.gmra.mxu0 %v1989
          %v2063 = vpop.f32.mrf.mxu0
          %v2064 = vadd.f32 %v1935, %v2063
          %v2065 = vpop.f32.mrf.mxu0
          %v2066 = vadd.f32 %v1935, %v2065
          %2067 = vmatmul.bf16.gmra.mxu0 %v1992
          %v2068 = vpop.f32.mrf.mxu0
          %v2069 = vadd.f32 %v1935, %v2068
          %v2070 = vpop.f32.mrf.mxu0
          %v2071 = vadd.f32 %v1935, %v2070
          %2072 = vmatmul.bf16.gmra.mxu0 %v1995
          %v2073 = vpop.f32.mrf.mxu0
          %v2074 = vadd.f32 %v1935, %v2073
          %v2075 = vpop.f32.mrf.mxu0
          %v2076 = vadd.f32 %v1935, %v2075
          %2077 = vmatmul.bf16.gmra.mxu0 %v1998
          %v2078 = vpop.f32.mrf.mxu0
          %v2079 = vadd.f32 %v1935, %v2078
          %v2080 = vpop.f32.mrf.mxu0
          %v2081 = vadd.f32 %v1935, %v2080
          %2082 = vmatmul.bf16.gmra.mxu0 %v2001
          %v2083 = vpop.f32.mrf.mxu0
          %v2084 = vadd.f32 %v1935, %v2083
          %v2085 = vpop.f32.mrf.mxu0
          %v2086 = vadd.f32 %v1935, %v2085
          %2087 = vmatmul.bf16.gmra.mxu0 %v2004
          %v2088 = vpop.f32.mrf.mxu0
          %v2089 = vadd.f32 %v1935, %v2088
          %v2090 = vpop.f32.mrf.mxu0
          %v2091 = vadd.f32 %v1935, %v2090
          %2092 = vmatmul.bf16.gmra.mxu0 %v2007
          %v2093 = vpop.f32.mrf.mxu0
          %v2094 = vadd.f32 %v1935, %v2093
          %v2095 = vpop.f32.mrf.mxu0
          %v2096 = vadd.f32 %v1935, %v2095
          %2097 = vdwg.mxu0
          %v2098 = vmax.f32 %v2019, 0.0
          %v2099 = vmax.f32 %v2021, 0.0
          %v2100 = vmax.f32 %v2024, 0.0
          %v2101 = vmax.f32 %v2026, 0.0
          %v2102 = vmax.f32 %v2029, 0.0
          %v2103 = vmax.f32 %v2031, 0.0
          %v2104 = vmax.f32 %v2034, 0.0
          %v2105 = vmax.f32 %v2036, 0.0
          %v2106 = vmax.f32 %v2039, 0.0
          %v2107 = vmax.f32 %v2041, 0.0
          %v2108 = vmax.f32 %v2044, 0.0
          %v2109 = vmax.f32 %v2046, 0.0
          %v2110 = vmax.f32 %v2049, 0.0
          %v2111 = vmax.f32 %v2051, 0.0
          %v2112 = vmax.f32 %v2054, 0.0
          %v2113 = vmax.f32 %v2056, 0.0
          %v2114 = vmax.f32 %v2059, 0.0
          %v2115 = vmax.f32 %v2061, 0.0
          %v2116 = vmax.f32 %v2064, 0.0
          %v2117 = vmax.f32 %v2066, 0.0
          %v2118 = vmax.f32 %v2069, 0.0
          %v2119 = vmax.f32 %v2071, 0.0
          %v2120 = vmax.f32 %v2074, 0.0
          %v2121 = vmax.f32 %v2076, 0.0
          %v2122 = vmax.f32 %v2079, 0.0
          %v2123 = vmax.f32 %v2081, 0.0
          %v2124 = vmax.f32 %v2084, 0.0
          %v2125 = vmax.f32 %v2086, 0.0
          %v2126 = vmax.f32 %v2089, 0.0
          %v2127 = vmax.f32 %v2091, 0.0
          %v2128 = vmax.f32 %v2094, 0.0
          %v2129 = vmax.f32 %v2096, 0.0
          %v2130 = vpack.c.bf16 %v2099, %v2098
          %v2131 = vpack.c.bf16 %v2101, %v2100
          %v2132 = vpack.c.bf16 %v2103, %v2102
          %v2133 = vpack.c.bf16 %v2105, %v2104
          %v2134 = vpack.c.bf16 %v2107, %v2106
          %v2135 = vpack.c.bf16 %v2109, %v2108
          %v2136 = vpack.c.bf16 %v2111, %v2110
          %v2137 = vpack.c.bf16 %v2113, %v2112
          %v2138 = vpack.c.bf16 %v2115, %v2114
          %v2139 = vpack.c.bf16 %v2117, %v2116
          %v2140 = vpack.c.bf16 %v2119, %v2118
          %v2141 = vpack.c.bf16 %v2121, %v2120
          %v2142 = vpack.c.bf16 %v2123, %v2122
          %v2143 = vpack.c.bf16 %v2125, %v2124
          %v2144 = vpack.c.bf16 %v2127, %v2126
          %v2145 = vpack.c.bf16 %v2129, %v2128
          %v2146 = vld [vmem:[%s5] sm:$0x1]
          %v2147 = vld [vmem:[#allocation2] sm:$0x1]
          %2149 = vset.pattern.permute.xlu0 0
          %2150 = vperm.xlu0 %2149, %v2147
          %v2151 = vpop.permute.xlu0 %2150
          %v2153 = vperm.slane %v2151, 0
          %v2155 = vsel %vm622, %v2146, 0
          %v2158 = vsel %vm622, %v2130, 0
          %v2161 = vsel %vm622, %v2131, 0
          %v2164 = vsel %vm622, %v2132, 0
          %v2167 = vsel %vm622, %v2133, 0
          %v2170 = vsel %vm622, %v2134, 0
          %v2173 = vsel %vm622, %v2135, 0
          %v2176 = vsel %vm622, %v2136, 0
          %v2179 = vsel %vm622, %v2137, 0
          %v2182 = vsel %vm622, %v2138, 0
          %v2185 = vsel %vm622, %v2139, 0
          %v2188 = vsel %vm622, %v2140, 0
          %v2191 = vsel %vm622, %v2141, 0
          %v2194 = vsel %vm622, %v2142, 0
          %v2197 = vsel %vm622, %v2143, 0
          %v2200 = vsel %vm622, %v2144, 0
          %v2203 = vsel %vm622, %v2145, 0
          %2205 = vmatpush.bf16.xpose.msra.mxu0 %v2179
          %2206 = vmatpush.bf16.xpose.msra.mxu0 %v2176
          %2207 = vmatpush.bf16.xpose.msra.mxu0 %v2173
          %2208 = vmatpush.bf16.xpose.msra.mxu0 %v2170
          %2209 = vmatpush.bf16.xpose.msra.mxu0 %v2167
          %2210 = vmatpush.bf16.xpose.msra.mxu0 %v2164
          %2211 = vmatpush.bf16.xpose.msra.mxu0 %v2161
          %2212 = vmatpush.bf16.xpose.msra.mxu0 %v2158
          %2213 = vmatmul.bf16.gmra.mxu0 %v2155
          %v2214 = vpop.f32.mrf.mxu0
          %v2215 = vadd.f32 %v2153, %v2214
          %v2216 = vpop.f32.mrf.mxu0
          %2217 = vdwg.mxu0
          %2218 = vmatpush.bf16.xpose.msra.mxu0 %v2203
          %2219 = vmatpush.bf16.xpose.msra.mxu0 %v2200
          %2220 = vmatpush.bf16.xpose.msra.mxu0 %v2197
          %2221 = vmatpush.bf16.xpose.msra.mxu0 %v2194
          %2222 = vmatpush.bf16.xpose.msra.mxu0 %v2191
          %2223 = vmatpush.bf16.xpose.msra.mxu0 %v2188
          %2224 = vmatpush.bf16.xpose.msra.mxu0 %v2185
          %2225 = vmatpush.bf16.xpose.msra.mxu0 %v2182
          %2226 = vmatmul.bf16.gmra.mxu0 %v2155
          %v2227 = vpop.f32.mrf.mxu0
          %v2228 = vadd.f32 %v2153, %v2227
          %v2229 = vpop.f32.mrf.mxu0
          %2230 = vdwg.mxu0
          %v2231 = vxor.u32 %v2215, 2147483648
          %v2232 = vxor.u32 %v2228, 2147483648
          %v2233 = vmul.f32 %v2231, 1.442695
          %v2234 = vpow.pop %v2233
          %v2235 = vmul.f32 %v2232, 1.442695
          %v2236 = vpow.pop %v2235
          %v2237 = vadd.f32 %v2234, 1.0
          %v2238 = vadd.f32 %v2236, 1.0
          %v2239 = vrcp.pop %v2237
          %v2240 = vmul.f32 %v2237, %v2239
          %v2241 = vsub.f32 1.0, %v2240
          %v2242 = vmul.f32 %v2239, %v2241
          %v2243 = vadd.f32 %v2239, %v2242
          %vm2244 = vweird.f32 %v2237
          %vm2245 = vweird.f32 %v2239
          %vm2246 = vmor %vm2244, %vm2245
          %v2247 = vsel %vm2246, %v2239, %v2243
          %v2248 = vand.u32 2147483647, %v2237
          %vm2249 = vcmp.eq.f32.partialorder %v2248, 8.507059e+37
          %v2250 = vand.u32 %v2237, 2147483648
          %v2251 = vor.u32 1.1754944e-38, %v2250
          %v2252 = vsel %vm2249, %v2251, %v2247
          %v2253 = vmul.f32 1.0, %v2252
          %v2254 = vrcp.pop %v2238
          %v2255 = vmul.f32 %v2238, %v2254
          %v2256 = vsub.f32 1.0, %v2255
          %v2257 = vmul.f32 %v2254, %v2256
          %v2258 = vadd.f32 %v2254, %v2257
          %vm2259 = vweird.f32 %v2238
          %vm2260 = vweird.f32 %v2254
          %vm2261 = vmor %vm2259, %vm2260
          %v2262 = vsel %vm2261, %v2254, %v2258
          %v2263 = vand.u32 2147483647, %v2238
          %vm2264 = vcmp.eq.f32.partialorder %v2263, 8.507059e+37
          %v2265 = vand.u32 %v2238, 2147483648
          %v2266 = vor.u32 1.1754944e-38, %v2265
          %v2267 = vsel %vm2264, %v2266, %v2262
          %v2268 = vmul.f32 1.0, %v2267
          %v2271 = vrot.slane %v2268, 7
          %vm2272 = vcmask 1040384
          %v2273 = vsel %vm2272, %v2253, %v2271
          %v2275 = vlaneseq
          %vm2276 = vcmp.ge.s32.totalorder %v2275, 0
          %vm2277 = vcmp.lt.s32.totalorder %v2275, 256
          %vm2278 = vmand %vm2276, %vm2277
          %s2279 = sshra.s32 %s283, 1
          %s2280 = sand.u32 %s283, 1
          %s2281 = sshra.s32 %s283, 1
          %s2282 = sand.u32 %s283, 1
          %s2283 = smul.u32 %s2279, 2
          %s2284 = smul.u32 %s2283, 2
          %s2285 = sadd.s32 %s2284, %s2282
          %s2286 = scalar_lea.vmem %s274, %s2285 [#allocation3]
          %2287 = vst.msk [vmem:[%s2286] ss:$2 sm:$0x3] %vm2278, %v2273
        $region53: #{tpu_custom_call.1} parent=47 // loop_footer
          %s287 = sadd.s32 1, %s283
        $region54: #{tpu_custom_call.1} parent=47 // loop_footer_branch
          %282 = sbr.rel target = $region50
        $region55: #{tpu_custom_call.1} parent=47 // loop_exit
          _
        %s2288 = sand.u32 %s183, 1
        %s2289 = scalar_lea.sflag [#allocation4], %s2288
        %s2290 = sand.u32 %s183, 1
        %s2291 = smul.addr %s2290, 4
        %s2292 = scalar_lea.vmem [#allocation3], %s2291
        // Predicated region
        $region56: #{tpu_custom_call.1} parent=47 // pred_check
          %p2293 = pneg %p193
        $region57: #{tpu_custom_call.1} parent=47 // pred_check_branch
          %2295 = sbr.rel (%p2293) target = $region59
        $region58: #{tpu_custom_call.1} parent=47 // pred_region
          %2297 = vsyncadd %s2289, 0
          %s2298 = smul.addr %s23, 2
          %s2299 = smul.addr %s2298, 2
          %s2300 = scalar_lea.hbm %s7, %s2299
          %s2302 = sshll.u32 %s2292, 4
          %s2303 = int_to_ptr.vmem [resolvable:$true] %s2302
          %s2304 = sshll.u32 %s2300, 4
          %s2305 = int_to_ptr.hbm [resolvable:$true] %s2304
          %2307 = dma.vmem_to_hbm [thread:$0]  %s2303, 64, %s2305, %s2289
        $region59: #{tpu_custom_call.1} parent=47 // pred_fallthru
          _
      $region48: #{tpu_custom_call.1} parent=5 // pred_fallthru
        _
      %p2308 = scmp.le.s32.totalorder 2, %s18
      // Predicated region
      $region60: #{tpu_custom_call.1} parent=5 // pred_check
        %p2309 = pneg %p2308
      $region61: #{tpu_custom_call.1} parent=5 // pred_check_branch
        %2311 = sbr.rel (%p2309) target = $region63
      $region62: #{tpu_custom_call.1} parent=5 // pred_region
        %s2312 = ssub.s32 %s18, 2
        // Predicated region
        $region64: #{tpu_custom_call.1} parent=62 // pred_check
          %p2313 = pneg %p199
        $region65: #{tpu_custom_call.1} parent=62 // pred_check_branch
          %2315 = sbr.rel (%p2313) target = $region67
        $region66: #{tpu_custom_call.1} parent=62 // pred_region
          %s2316 = sand.u32 %s184, 1
          %s2317 = scalar_lea.sflag [#allocation4], %s2316
          %s2318 = sand.u32 %s184, 1
          %s2319 = smul.addr %s2318, 4
          %s2320 = scalar_lea.vmem [#allocation3], %s2319
          %2322 = dma.done %s2317, 64
        $region67: #{tpu_custom_call.1} parent=62 // pred_fallthru
          _
      $region63: #{tpu_custom_call.1} parent=5 // pred_fallthru
        _
    $region6: #{tpu_custom_call.1} parent=1 // loop_footer
      %s22 = sadd.s32 1, %s18
    $region7: #{tpu_custom_call.1} parent=1 // loop_footer_branch
      %17 = sbr.rel target = $region3
    $region8: #{tpu_custom_call.1} parent=1 // loop_exit
      _
    %2323 = vsyncpa [#allocation4], 1
    %s2324 = scalar_lea.sflag [#allocation4], 1
    %2325 = vsyncpa %s2324, 1

</llo_original>
